<compile_context>
chip_gen: v6e
topology: v6e:2x2x1
jax: 0.10.0
libtpu: 0.0.40
codegen_flags: <defaults>
</compile_context>

<pallas_src>
import math
from functools import partial

import jax
import jax.numpy as jnp
from jax import lax
from jax.experimental import pallas as pl
from jax.experimental.pallas import tpu as pltpu


def _dot_t(a, b):
    """a:(M,K) contracted with b:(N,K) -> (M,N). MXU performs trans_b; f32 accum."""
    return lax.dot_general(
        a, b, (((1,), (1,)), ((), ())), preferred_element_type=jnp.float32
    )


def _layer_norm(y, gamma, beta, eps=1e-5):
    mu = jnp.mean(y, axis=-1, keepdims=True)
    var = jnp.mean((y - mu) ** 2, axis=-1, keepdims=True)
    return (y - mu) * lax.rsqrt(var + eps) * gamma + beta


def encoder_layer_kernel(
    x_ref, mask_ref,
    wq_ref, wk_ref, wv_ref, wo_ref, bo_ref,
    g1_ref, be1_ref,
    gff_ref, bff_ref,
    w1_ref, bf1_ref, w2_ref, bf2_ref,
    g2_ref, be2_ref,
    o_ref,
    *, num_heads,
):
    x = x_ref[0].astype(jnp.float32)          # (S, D)
    mask = mask_ref[0]                        # (S, S)
    S, D = x.shape
    d_k = D // num_heads
    scale = 1.0 / math.sqrt(d_k)
    neg_inf = jnp.float32(-1e9)

    # ---- multi-head self-attention (query = key = value = x) ----
    q = _dot_t(x, wq_ref[...])                # (S, D)
    k = _dot_t(x, wk_ref[...])                # (S, D)
    v = _dot_t(x, wv_ref[...])                # (S, D)

    # Fold the head-concat into the output projection: sum_h ctx_h @ Wo[:, h]^T
    acc = jnp.zeros((S, D), jnp.float32)
    for h in range(num_heads):                # static unroll, num_heads is small
        lo = h * d_k
        qh = q[:, lo:lo + d_k]                # (S, d_k)
        kh = k[:, lo:lo + d_k]
        vh = v[:, lo:lo + d_k]
        scores = _dot_t(qh, kh) * scale       # (S, S)
        scores = jnp.where(mask == 0.0, neg_inf, scores)
        m = jnp.max(scores, axis=-1, keepdims=True)
        p = jnp.exp(scores - m)
        p = p / jnp.sum(p, axis=-1, keepdims=True)
        # TODO(synk): attention dropout treated as identity (inference mode);
        #             training-mode dropout would use pltpu.prng_seed/prng_random_bits.
        ctx_h = jnp.dot(p, vh, preferred_element_type=jnp.float32)      # (S, d_k)
        acc = acc + _dot_t(ctx_h, wo_ref[:, lo:lo + d_k])               # (S, D)
    attn_out = acc + bo_ref[...]              # bias broadcast (1, D) -> (S, D)

    # ---- residual + LayerNorm1 ----
    y1 = _layer_norm(attn_out + x, g1_ref[...], be1_ref[...])

    # ---- feed-forward (has its own leading LayerNorm in this module) ----
    h0 = _layer_norm(y1, gff_ref[...], bff_ref[...])
    h1 = jnp.maximum(_dot_t(h0, w1_ref[...]) + bf1_ref[...], 0.0)       # (S, Dff)
    ff = _dot_t(h1, w2_ref[...]) + bf2_ref[...]                         # (S, D)

    # ---- residual + LayerNorm2 ----
    out = _layer_norm(ff + y1, g2_ref[...], be2_ref[...])
    o_ref[0] = out.astype(o_ref.dtype)


def encoder_layer_forward(x, mask, params, *, num_heads):
    """x: [B, S, D] f32; mask: [B, S, S] (nonzero = attend); params in PyTorch layout."""
    B, S, D = x.shape
    Dff = params["w1"].shape[0]
    mask_f = mask.astype(jnp.float32)
    row = lambda v: v.reshape(1, -1)          # 1-D params -> (1, N) for VMEM layout

    def full2d(shape):
        return pl.BlockSpec(shape, lambda b: (0, 0))

    kernel = partial(encoder_layer_kernel, num_heads=num_heads)

    return pl.pallas_call(
        kernel,
        out_shape=jax.ShapeDtypeStruct((B, S, D), jnp.float32),
        grid_spec=pltpu.PrefetchScalarGridSpec(
            num_scalar_prefetch=0,
            grid=(B,),
            in_specs=[
                pl.BlockSpec((1, S, D), lambda b: (b, 0, 0)),   # x
                pl.BlockSpec((1, S, S), lambda b: (b, 0, 0)),   # mask
                full2d((D, D)),            # Wq  (out, in) — no wrapper transpose
                full2d((D, D)),            # Wk
                full2d((D, D)),            # Wv
                full2d((D, D)),            # Wo
                full2d((1, D)),            # bo
                full2d((1, D)),            # LN1 gamma
                full2d((1, D)),            # LN1 beta
                full2d((1, D)),            # FF-LN gamma
                full2d((1, D)),            # FF-LN beta
                full2d((Dff, D)),          # W1
                full2d((1, Dff)),          # b1
                full2d((D, Dff)),          # W2
                full2d((1, D)),            # b2
                full2d((1, D)),            # LN2 gamma
                full2d((1, D)),            # LN2 beta
            ],
            out_specs=pl.BlockSpec((1, S, D), lambda b: (b, 0, 0)),
        ),
        compiler_params=pltpu.CompilerParams(
            dimension_semantics=("parallel",),   # batch axis shards across TCs (v7x)
        ),
    )(
        x, mask_f,
        params["wq"], params["wk"], params["wv"],
        params["wo"], row(params["bo"]),
        row(params["g1"]), row(params["be1"]),
        row(params["gff"]), row(params["bff"]),
        params["w1"], row(params["bf1"]),
        params["w2"], row(params["bf2"]),
        row(params["g2"]), row(params["be2"]),
    )


def ref_encoder_layer(x, mask, params, *, num_heads):
    """Pure-JAX reference matching the PyTorch module in eval mode."""
    B, S, D = x.shape
    dk = D // num_heads

    def lin(a, w, b=None):
        y = jnp.einsum("bsd,od->bso", a, w)
        return y if b is None else y + b

    def ln(y, g, b, eps=1e-5):
        mu = y.mean(-1, keepdims=True)
        var = ((y - mu) ** 2).mean(-1, keepdims=True)
        return (y - mu) / jnp.sqrt(var + eps) * g + b

    q = lin(x, params["wq"]).reshape(B, S, num_heads, dk).transpose(0, 2, 1, 3)
    k = lin(x, params["wk"]).reshape(B, S, num_heads, dk).transpose(0, 2, 1, 3)
    v = lin(x, params["wv"]).reshape(B, S, num_heads, dk).transpose(0, 2, 1, 3)
    scores = jnp.einsum("bhqd,bhkd->bhqk", q, k) / math.sqrt(dk)
    scores = jnp.where(mask[:, None, :, :] == 0, -1e9, scores)
    attn = jax.nn.softmax(scores, axis=-1)
    ctx = jnp.einsum("bhqk,bhkd->bhqd", attn, v)
    ctx = ctx.transpose(0, 2, 1, 3).reshape(B, S, D)
    attn_out = lin(ctx, params["wo"], params["bo"])
    y1 = ln(attn_out + x, params["g1"], params["be1"])
    h = ln(y1, params["gff"], params["bff"])
    h = jax.nn.relu(lin(h, params["w1"], params["bf1"]))
    ff = lin(h, params["w2"], params["bf2"])
    return ln(ff + y1, params["g2"], params["be2"])


if __name__ == "__main__":
    batch, seq, d_model, num_heads, d_ff = 2, 8, 32, 4, 64

    key = jax.random.PRNGKey(0)
    keys = jax.random.split(key, 16)

    def u(k, shape, bound):
        return jax.random.uniform(k, shape, jnp.float32, -bound, bound)

    bd = 1.0 / math.sqrt(d_model)
    bf = 1.0 / math.sqrt(d_ff)

    params = dict(
        wq=u(keys[0], (d_model, d_model), bd),
        wk=u(keys[1], (d_model, d_model), bd),
        wv=u(keys[2], (d_model, d_model), bd),
        wo=u(keys[3], (d_model, d_model), bd),
        bo=u(keys[4], (d_model,), bd),
        g1=1.0 + u(keys[5], (d_model,), 0.2),
        be1=u(keys[6], (d_model,), 0.2),
        gff=1.0 + u(keys[7], (d_model,), 0.2),
        bff=u(keys[8], (d_model,), 0.2),
        w1=u(keys[9], (d_ff, d_model), bd),
        bf1=u(keys[10], (d_ff,), bd),
        w2=u(keys[11], (d_model, d_ff), bf),
        bf2=u(keys[12], (d_model,), bf),
        g2=1.0 + u(keys[13], (d_model,), 0.2),
        be2=u(keys[14], (d_model,), 0.2),
    )

    x = jax.random.normal(keys[15], (batch, seq, d_model), jnp.float32)
    # attention mask: attend everywhere, except batch 1 masks its last 2 key positions
    mask = jnp.ones((batch, seq, seq), jnp.float32)
    mask = mask.at[1, :, seq - 2:].set(0.0)

    out = encoder_layer_forward(x, mask, params, num_heads=num_heads)
    out = jax.block_until_ready(out)

    ref = ref_encoder_layer(x, mask, params, num_heads=num_heads)
    assert out.shape == (batch, seq, d_model)
    assert jnp.allclose(out, ref, atol=2e-3, rtol=2e-3), float(
        jnp.max(jnp.abs(out - ref))
    )

    print("KERNEL_OK")
</pallas_src>

<mosaic_0001>
module attributes {stable_mosaic.version = 11 : i64} {
  func.func @encoder_layer_kernel(%arg0: i32, %arg1: memref<1x8x32xf32, #tpu.memory_space<vmem>>, %arg2: memref<1x8x8xf32, #tpu.memory_space<vmem>>, %arg3: memref<32x32xf32, #tpu.memory_space<vmem>>, %arg4: memref<32x32xf32, #tpu.memory_space<vmem>>, %arg5: memref<32x32xf32, #tpu.memory_space<vmem>>, %arg6: memref<32x32xf32, #tpu.memory_space<vmem>>, %arg7: memref<1x32xf32, #tpu.memory_space<vmem>>, %arg8: memref<1x32xf32, #tpu.memory_space<vmem>>, %arg9: memref<1x32xf32, #tpu.memory_space<vmem>>, %arg10: memref<1x32xf32, #tpu.memory_space<vmem>>, %arg11: memref<1x32xf32, #tpu.memory_space<vmem>>, %arg12: memref<64x32xf32, #tpu.memory_space<vmem>>, %arg13: memref<1x64xf32, #tpu.memory_space<vmem>>, %arg14: memref<32x64xf32, #tpu.memory_space<vmem>>, %arg15: memref<1x32xf32, #tpu.memory_space<vmem>>, %arg16: memref<1x32xf32, #tpu.memory_space<vmem>>, %arg17: memref<1x32xf32, #tpu.memory_space<vmem>>, %arg18: memref<1x8x32xf32, #tpu.memory_space<vmem>>) attributes {dimension_semantics = [#tpu.dimension_semantics<parallel>], iteration_bounds = array<i64: 2>, scalar_prefetch = 0 : i64, scratch_operands = 0 : i64, tpu.core_type = #tpu.core_type<tc>, window_params = [{transform_indices = @transform_0, window_bounds = array<i64: 1, 8, 32>}, {transform_indices = @transform_1, window_bounds = array<i64: 1, 8, 8>}, {pipeline_mode = #tpu.pipeline_mode<synchronous>, transform_indices = @transform_2, window_bounds = array<i64: 32, 32>}, {pipeline_mode = #tpu.pipeline_mode<synchronous>, transform_indices = @transform_3, window_bounds = array<i64: 32, 32>}, {pipeline_mode = #tpu.pipeline_mode<synchronous>, transform_indices = @transform_4, window_bounds = array<i64: 32, 32>}, {pipeline_mode = #tpu.pipeline_mode<synchronous>, transform_indices = @transform_5, window_bounds = array<i64: 32, 32>}, {pipeline_mode = #tpu.pipeline_mode<synchronous>, transform_indices = @transform_6, window_bounds = array<i64: 1, 32>}, {pipeline_mode = #tpu.pipeline_mode<synchronous>, transform_indices = @transform_7, window_bounds = array<i64: 1, 32>}, {pipeline_mode = #tpu.pipeline_mode<synchronous>, transform_indices = @transform_8, window_bounds = array<i64: 1, 32>}, {pipeline_mode = #tpu.pipeline_mode<synchronous>, transform_indices = @transform_9, window_bounds = array<i64: 1, 32>}, {pipeline_mode = #tpu.pipeline_mode<synchronous>, transform_indices = @transform_10, window_bounds = array<i64: 1, 32>}, {pipeline_mode = #tpu.pipeline_mode<synchronous>, transform_indices = @transform_11, window_bounds = array<i64: 64, 32>}, {pipeline_mode = #tpu.pipeline_mode<synchronous>, transform_indices = @transform_12, window_bounds = array<i64: 1, 64>}, {pipeline_mode = #tpu.pipeline_mode<synchronous>, transform_indices = @transform_13, window_bounds = array<i64: 32, 64>}, {pipeline_mode = #tpu.pipeline_mode<synchronous>, transform_indices = @transform_14, window_bounds = array<i64: 1, 32>}, {pipeline_mode = #tpu.pipeline_mode<synchronous>, transform_indices = @transform_15, window_bounds = array<i64: 1, 32>}, {pipeline_mode = #tpu.pipeline_mode<synchronous>, transform_indices = @transform_16, window_bounds = array<i64: 1, 32>}, {transform_indices = @transform_17, window_bounds = array<i64: 1, 8, 32>}]} {
    %c0 = arith.constant 0 : index
    %c0_0 = arith.constant 0 : index
    %c0_1 = arith.constant 0 : index
    %0 = vector.load %arg1[%c0, %c0_0, %c0_1] : memref<1x8x32xf32, #tpu.memory_space<vmem>>, vector<1x8x32xf32>
    %1 = vector.shape_cast %0 : vector<1x8x32xf32> to vector<8x32xf32>
    %c0_2 = arith.constant 0 : index
    %c0_3 = arith.constant 0 : index
    %c0_4 = arith.constant 0 : index
    %2 = vector.load %arg2[%c0_2, %c0_3, %c0_4] : memref<1x8x8xf32, #tpu.memory_space<vmem>>, vector<1x8x8xf32>
    %3 = vector.shape_cast %2 : vector<1x8x8xf32> to vector<8x8xf32>
    %c0_5 = arith.constant 0 : index
    %c0_6 = arith.constant 0 : index
    %4 = vector.load %arg3[%c0_5, %c0_6] : memref<32x32xf32, #tpu.memory_space<vmem>>, vector<32x32xf32>
    %cst = arith.constant dense<0.000000e+00> : vector<8x32xf32>
    %5 = tpu.matmul %1, %4, %cst {dimension_numbers = #tpu.dot_dimension_numbers<[1], [1], [0], [0], [0, 0, 1, 0], [], []>} : vector<8x32xf32>, vector<32x32xf32>, vector<8x32xf32> -> vector<8x32xf32>
    %c0_7 = arith.constant 0 : index
    %c0_8 = arith.constant 0 : index
    %6 = vector.load %arg4[%c0_7, %c0_8] : memref<32x32xf32, #tpu.memory_space<vmem>>, vector<32x32xf32>
    %cst_9 = arith.constant dense<0.000000e+00> : vector<8x32xf32>
    %7 = tpu.matmul %1, %6, %cst_9 {dimension_numbers = #tpu.dot_dimension_numbers<[1], [1], [0], [0], [0, 0, 1, 0], [], []>} : vector<8x32xf32>, vector<32x32xf32>, vector<8x32xf32> -> vector<8x32xf32>
    %c0_10 = arith.constant 0 : index
    %c0_11 = arith.constant 0 : index
    %8 = vector.load %arg5[%c0_10, %c0_11] : memref<32x32xf32, #tpu.memory_space<vmem>>, vector<32x32xf32>
    %cst_12 = arith.constant dense<0.000000e+00> : vector<8x32xf32>
    %9 = tpu.matmul %1, %8, %cst_12 {dimension_numbers = #tpu.dot_dimension_numbers<[1], [1], [0], [0], [0, 0, 1, 0], [], []>} : vector<8x32xf32>, vector<32x32xf32>, vector<8x32xf32> -> vector<8x32xf32>
    %cst_13 = arith.constant 0.000000e+00 : f32
    %10 = vector.broadcast %cst_13 : f32 to vector<8x32xf32>
    %11 = vector.extract_strided_slice %5 {offsets = [0, 0], sizes = [8, 8], strides = [1, 1]} : vector<8x32xf32> to vector<8x8xf32>
    %12 = vector.extract_strided_slice %7 {offsets = [0, 0], sizes = [8, 8], strides = [1, 1]} : vector<8x32xf32> to vector<8x8xf32>
    %13 = vector.extract_strided_slice %9 {offsets = [0, 0], sizes = [8, 8], strides = [1, 1]} : vector<8x32xf32> to vector<8x8xf32>
    %cst_14 = arith.constant dense<0.000000e+00> : vector<8x8xf32>
    %14 = tpu.matmul %11, %12, %cst_14 {dimension_numbers = #tpu.dot_dimension_numbers<[1], [1], [0], [0], [0, 0, 1, 0], [], []>} : vector<8x8xf32>, vector<8x8xf32>, vector<8x8xf32> -> vector<8x8xf32>
    %cst_15 = arith.constant 0.353553385 : f32
    %15 = vector.broadcast %cst_15 : f32 to vector<8x8xf32>
    %16 = arith.mulf %14, %15 : vector<8x8xf32>
    %cst_16 = arith.constant 0.000000e+00 : f32
    %17 = vector.broadcast %cst_16 : f32 to vector<8x8xf32>
    %18 = arith.cmpf oeq, %3, %17 : vector<8x8xf32>
    %cst_17 = arith.constant -1.000000e+09 : f32
    %19 = vector.broadcast %cst_17 : f32 to vector<8x8xf32>
    %20 = arith.select %18, %19, %16 : vector<8x8xi1>, vector<8x8xf32>
    %cst_18 = arith.constant dense<0xFF800000> : vector<8xf32>
    %21 = vector.multi_reduction <maximumf>, %20, %cst_18 [1] : vector<8x8xf32> to vector<8xf32>
    %22 = vector.shape_cast %21 : vector<8xf32> to vector<8x1xf32>
    %23 = vector.broadcast %22 : vector<8x1xf32> to vector<8x8xf32>
    %24 = arith.subf %20, %23 : vector<8x8xf32>
    %25 = math.exp %24 : vector<8x8xf32>
    %cst_19 = arith.constant dense<0.000000e+00> : vector<8xf32>
    %26 = vector.multi_reduction <add>, %25, %cst_19 [1] : vector<8x8xf32> to vector<8xf32>
    %27 = vector.shape_cast %26 : vector<8xf32> to vector<8x1xf32>
    %28 = vector.broadcast %27 : vector<8x1xf32> to vector<8x8xf32>
    %29 = arith.divf %25, %28 : vector<8x8xf32>
    %cst_20 = arith.constant dense<0.000000e+00> : vector<8x8xf32>
    %30 = tpu.matmul %29, %13, %cst_20 {dimension_numbers = #tpu.dot_dimension_numbers<[1], [0], [0], [1], [0, 0, 1, 1], [], []>} : vector<8x8xf32>, vector<8x8xf32>, vector<8x8xf32> -> vector<8x8xf32>
    %c0_21 = arith.constant 0 : index
    %c0_22 = arith.constant 0 : index
    %31 = vector.load %arg6[%c0_21, %c0_22] : memref<32x32xf32, #tpu.memory_space<vmem>>, vector<32x8xf32>
    %cst_23 = arith.constant dense<0.000000e+00> : vector<8x32xf32>
    %32 = tpu.matmul %30, %31, %cst_23 {dimension_numbers = #tpu.dot_dimension_numbers<[1], [1], [0], [0], [0, 0, 1, 0], [], []>} : vector<8x8xf32>, vector<32x8xf32>, vector<8x32xf32> -> vector<8x32xf32>
    %33 = arith.addf %10, %32 : vector<8x32xf32>
    %34 = vector.extract_strided_slice %5 {offsets = [0, 8], sizes = [8, 8], strides = [1, 1]} : vector<8x32xf32> to vector<8x8xf32>
    %35 = vector.extract_strided_slice %7 {offsets = [0, 8], sizes = [8, 8], strides = [1, 1]} : vector<8x32xf32> to vector<8x8xf32>
    %36 = vector.extract_strided_slice %9 {offsets = [0, 8], sizes = [8, 8], strides = [1, 1]} : vector<8x32xf32> to vector<8x8xf32>
    %cst_24 = arith.constant dense<0.000000e+00> : vector<8x8xf32>
    %37 = tpu.matmul %34, %35, %cst_24 {dimension_numbers = #tpu.dot_dimension_numbers<[1], [1], [0], [0], [0, 0, 1, 0], [], []>} : vector<8x8xf32>, vector<8x8xf32>, vector<8x8xf32> -> vector<8x8xf32>
    %cst_25 = arith.constant 0.353553385 : f32
    %38 = vector.broadcast %cst_25 : f32 to vector<8x8xf32>
    %39 = arith.mulf %37, %38 : vector<8x8xf32>
    %cst_26 = arith.constant 0.000000e+00 : f32
    %40 = vector.broadcast %cst_26 : f32 to vector<8x8xf32>
    %41 = arith.cmpf oeq, %3, %40 : vector<8x8xf32>
    %cst_27 = arith.constant -1.000000e+09 : f32
    %42 = vector.broadcast %cst_27 : f32 to vector<8x8xf32>
    %43 = arith.select %41, %42, %39 : vector<8x8xi1>, vector<8x8xf32>
    %cst_28 = arith.constant dense<0xFF800000> : vector<8xf32>
    %44 = vector.multi_reduction <maximumf>, %43, %cst_28 [1] : vector<8x8xf32> to vector<8xf32>
    %45 = vector.shape_cast %44 : vector<8xf32> to vector<8x1xf32>
    %46 = vector.broadcast %45 : vector<8x1xf32> to vector<8x8xf32>
    %47 = arith.subf %43, %46 : vector<8x8xf32>
    %48 = math.exp %47 : vector<8x8xf32>
    %cst_29 = arith.constant dense<0.000000e+00> : vector<8xf32>
    %49 = vector.multi_reduction <add>, %48, %cst_29 [1] : vector<8x8xf32> to vector<8xf32>
    %50 = vector.shape_cast %49 : vector<8xf32> to vector<8x1xf32>
    %51 = vector.broadcast %50 : vector<8x1xf32> to vector<8x8xf32>
    %52 = arith.divf %48, %51 : vector<8x8xf32>
    %cst_30 = arith.constant dense<0.000000e+00> : vector<8x8xf32>
    %53 = tpu.matmul %52, %36, %cst_30 {dimension_numbers = #tpu.dot_dimension_numbers<[1], [0], [0], [1], [0, 0, 1, 1], [], []>} : vector<8x8xf32>, vector<8x8xf32>, vector<8x8xf32> -> vector<8x8xf32>
    %c0_31 = arith.constant 0 : index
    %c8 = arith.constant 8 : index
    %54 = vector.load %arg6[%c0_31, %c8] : memref<32x32xf32, #tpu.memory_space<vmem>>, vector<32x8xf32>
    %cst_32 = arith.constant dense<0.000000e+00> : vector<8x32xf32>
    %55 = tpu.matmul %53, %54, %cst_32 {dimension_numbers = #tpu.dot_dimension_numbers<[1], [1], [0], [0], [0, 0, 1, 0], [], []>} : vector<8x8xf32>, vector<32x8xf32>, vector<8x32xf32> -> vector<8x32xf32>
    %56 = arith.addf %33, %55 : vector<8x32xf32>
    %57 = vector.extract_strided_slice %5 {offsets = [0, 16], sizes = [8, 8], strides = [1, 1]} : vector<8x32xf32> to vector<8x8xf32>
    %58 = vector.extract_strided_slice %7 {offsets = [0, 16], sizes = [8, 8], strides = [1, 1]} : vector<8x32xf32> to vector<8x8xf32>
    %59 = vector.extract_strided_slice %9 {offsets = [0, 16], sizes = [8, 8], strides = [1, 1]} : vector<8x32xf32> to vector<8x8xf32>
    %cst_33 = arith.constant dense<0.000000e+00> : vector<8x8xf32>
    %60 = tpu.matmul %57, %58, %cst_33 {dimension_numbers = #tpu.dot_dimension_numbers<[1], [1], [0], [0], [0, 0, 1, 0], [], []>} : vector<8x8xf32>, vector<8x8xf32>, vector<8x8xf32> -> vector<8x8xf32>
    %cst_34 = arith.constant 0.353553385 : f32
    %61 = vector.broadcast %cst_34 : f32 to vector<8x8xf32>
    %62 = arith.mulf %60, %61 : vector<8x8xf32>
    %cst_35 = arith.constant 0.000000e+00 : f32
    %63 = vector.broadcast %cst_35 : f32 to vector<8x8xf32>
    %64 = arith.cmpf oeq, %3, %63 : vector<8x8xf32>
    %cst_36 = arith.constant -1.000000e+09 : f32
    %65 = vector.broadcast %cst_36 : f32 to vector<8x8xf32>
    %66 = arith.select %64, %65, %62 : vector<8x8xi1>, vector<8x8xf32>
    %cst_37 = arith.constant dense<0xFF800000> : vector<8xf32>
    %67 = vector.multi_reduction <maximumf>, %66, %cst_37 [1] : vector<8x8xf32> to vector<8xf32>
    %68 = vector.shape_cast %67 : vector<8xf32> to vector<8x1xf32>
    %69 = vector.broadcast %68 : vector<8x1xf32> to vector<8x8xf32>
    %70 = arith.subf %66, %69 : vector<8x8xf32>
    %71 = math.exp %70 : vector<8x8xf32>
    %cst_38 = arith.constant dense<0.000000e+00> : vector<8xf32>
    %72 = vector.multi_reduction <add>, %71, %cst_38 [1] : vector<8x8xf32> to vector<8xf32>
    %73 = vector.shape_cast %72 : vector<8xf32> to vector<8x1xf32>
    %74 = vector.broadcast %73 : vector<8x1xf32> to vector<8x8xf32>
    %75 = arith.divf %71, %74 : vector<8x8xf32>
    %cst_39 = arith.constant dense<0.000000e+00> : vector<8x8xf32>
    %76 = tpu.matmul %75, %59, %cst_39 {dimension_numbers = #tpu.dot_dimension_numbers<[1], [0], [0], [1], [0, 0, 1, 1], [], []>} : vector<8x8xf32>, vector<8x8xf32>, vector<8x8xf32> -> vector<8x8xf32>
    %c0_40 = arith.constant 0 : index
    %c16 = arith.constant 16 : index
    %77 = vector.load %arg6[%c0_40, %c16] : memref<32x32xf32, #tpu.memory_space<vmem>>, vector<32x8xf32>
    %cst_41 = arith.constant dense<0.000000e+00> : vector<8x32xf32>
    %78 = tpu.matmul %76, %77, %cst_41 {dimension_numbers = #tpu.dot_dimension_numbers<[1], [1], [0], [0], [0, 0, 1, 0], [], []>} : vector<8x8xf32>, vector<32x8xf32>, vector<8x32xf32> -> vector<8x32xf32>
    %79 = arith.addf %56, %78 : vector<8x32xf32>
    %80 = vector.extract_strided_slice %5 {offsets = [0, 24], sizes = [8, 8], strides = [1, 1]} : vector<8x32xf32> to vector<8x8xf32>
    %81 = vector.extract_strided_slice %7 {offsets = [0, 24], sizes = [8, 8], strides = [1, 1]} : vector<8x32xf32> to vector<8x8xf32>
    %82 = vector.extract_strided_slice %9 {offsets = [0, 24], sizes = [8, 8], strides = [1, 1]} : vector<8x32xf32> to vector<8x8xf32>
    %cst_42 = arith.constant dense<0.000000e+00> : vector<8x8xf32>
    %83 = tpu.matmul %80, %81, %cst_42 {dimension_numbers = #tpu.dot_dimension_numbers<[1], [1], [0], [0], [0, 0, 1, 0], [], []>} : vector<8x8xf32>, vector<8x8xf32>, vector<8x8xf32> -> vector<8x8xf32>
    %cst_43 = arith.constant 0.353553385 : f32
    %84 = vector.broadcast %cst_43 : f32 to vector<8x8xf32>
    %85 = arith.mulf %83, %84 : vector<8x8xf32>
    %cst_44 = arith.constant 0.000000e+00 : f32
    %86 = vector.broadcast %cst_44 : f32 to vector<8x8xf32>
    %87 = arith.cmpf oeq, %3, %86 : vector<8x8xf32>
    %cst_45 = arith.constant -1.000000e+09 : f32
    %88 = vector.broadcast %cst_45 : f32 to vector<8x8xf32>
    %89 = arith.select %87, %88, %85 : vector<8x8xi1>, vector<8x8xf32>
    %cst_46 = arith.constant dense<0xFF800000> : vector<8xf32>
    %90 = vector.multi_reduction <maximumf>, %89, %cst_46 [1] : vector<8x8xf32> to vector<8xf32>
    %91 = vector.shape_cast %90 : vector<8xf32> to vector<8x1xf32>
    %92 = vector.broadcast %91 : vector<8x1xf32> to vector<8x8xf32>
    %93 = arith.subf %89, %92 : vector<8x8xf32>
    %94 = math.exp %93 : vector<8x8xf32>
    %cst_47 = arith.constant dense<0.000000e+00> : vector<8xf32>
    %95 = vector.multi_reduction <add>, %94, %cst_47 [1] : vector<8x8xf32> to vector<8xf32>
    %96 = vector.shape_cast %95 : vector<8xf32> to vector<8x1xf32>
    %97 = vector.broadcast %96 : vector<8x1xf32> to vector<8x8xf32>
    %98 = arith.divf %94, %97 : vector<8x8xf32>
    %cst_48 = arith.constant dense<0.000000e+00> : vector<8x8xf32>
    %99 = tpu.matmul %98, %82, %cst_48 {dimension_numbers = #tpu.dot_dimension_numbers<[1], [0], [0], [1], [0, 0, 1, 1], [], []>} : vector<8x8xf32>, vector<8x8xf32>, vector<8x8xf32> -> vector<8x8xf32>
    %c0_49 = arith.constant 0 : index
    %c24 = arith.constant 24 : index
    %100 = vector.load %arg6[%c0_49, %c24] : memref<32x32xf32, #tpu.memory_space<vmem>>, vector<32x8xf32>
    %cst_50 = arith.constant dense<0.000000e+00> : vector<8x32xf32>
    %101 = tpu.matmul %99, %100, %cst_50 {dimension_numbers = #tpu.dot_dimension_numbers<[1], [1], [0], [0], [0, 0, 1, 0], [], []>} : vector<8x8xf32>, vector<32x8xf32>, vector<8x32xf32> -> vector<8x32xf32>
    %102 = arith.addf %79, %101 : vector<8x32xf32>
    %c0_51 = arith.constant 0 : index
    %c0_52 = arith.constant 0 : index
    %103 = vector.load %arg7[%c0_51, %c0_52] : memref<1x32xf32, #tpu.memory_space<vmem>>, vector<1x32xf32>
    %104 = vector.broadcast %103 : vector<1x32xf32> to vector<8x32xf32>
    %105 = arith.addf %102, %104 : vector<8x32xf32>
    %106 = arith.addf %105, %1 : vector<8x32xf32>
    %c0_53 = arith.constant 0 : index
    %c0_54 = arith.constant 0 : index
    %107 = vector.load %arg8[%c0_53, %c0_54] : memref<1x32xf32, #tpu.memory_space<vmem>>, vector<1x32xf32>
    %c0_55 = arith.constant 0 : index
    %c0_56 = arith.constant 0 : index
    %108 = vector.load %arg9[%c0_55, %c0_56] : memref<1x32xf32, #tpu.memory_space<vmem>>, vector<1x32xf32>
    %cst_57 = arith.constant dense<0.000000e+00> : vector<8xf32>
    %109 = vector.multi_reduction <add>, %106, %cst_57 [1] : vector<8x32xf32> to vector<8xf32>
    %110 = vector.shape_cast %109 : vector<8xf32> to vector<8x1xf32>
    %cst_58 = arith.constant 3.200000e+01 : f32
    %111 = vector.broadcast %cst_58 : f32 to vector<8x1xf32>
    %112 = arith.divf %110, %111 : vector<8x1xf32>
    %113 = vector.broadcast %112 : vector<8x1xf32> to vector<8x32xf32>
    %114 = arith.subf %106, %113 : vector<8x32xf32>
    %115 = arith.mulf %114, %114 : vector<8x32xf32>
    %cst_59 = arith.constant dense<0.000000e+00> : vector<8xf32>
    %116 = vector.multi_reduction <add>, %115, %cst_59 [1] : vector<8x32xf32> to vector<8xf32>
    %117 = vector.shape_cast %116 : vector<8xf32> to vector<8x1xf32>
    %cst_60 = arith.constant 3.200000e+01 : f32
    %118 = vector.broadcast %cst_60 : f32 to vector<8x1xf32>
    %119 = arith.divf %117, %118 : vector<8x1xf32>
    %120 = vector.broadcast %112 : vector<8x1xf32> to vector<8x32xf32>
    %121 = arith.subf %106, %120 : vector<8x32xf32>
    %cst_61 = arith.constant 9.99999974E-6 : f32
    %122 = vector.broadcast %cst_61 : f32 to vector<8x1xf32>
    %123 = arith.addf %119, %122 : vector<8x1xf32>
    %124 = math.rsqrt %123 : vector<8x1xf32>
    %125 = vector.broadcast %124 : vector<8x1xf32> to vector<8x32xf32>
    %126 = arith.mulf %121, %125 : vector<8x32xf32>
    %127 = vector.broadcast %107 : vector<1x32xf32> to vector<8x32xf32>
    %128 = arith.mulf %126, %127 : vector<8x32xf32>
    %129 = vector.broadcast %108 : vector<1x32xf32> to vector<8x32xf32>
    %130 = arith.addf %128, %129 : vector<8x32xf32>
    %c0_62 = arith.constant 0 : index
    %c0_63 = arith.constant 0 : index
    %131 = vector.load %arg10[%c0_62, %c0_63] : memref<1x32xf32, #tpu.memory_space<vmem>>, vector<1x32xf32>
    %c0_64 = arith.constant 0 : index
    %c0_65 = arith.constant 0 : index
    %132 = vector.load %arg11[%c0_64, %c0_65] : memref<1x32xf32, #tpu.memory_space<vmem>>, vector<1x32xf32>
    %cst_66 = arith.constant dense<0.000000e+00> : vector<8xf32>
    %133 = vector.multi_reduction <add>, %130, %cst_66 [1] : vector<8x32xf32> to vector<8xf32>
    %134 = vector.shape_cast %133 : vector<8xf32> to vector<8x1xf32>
    %cst_67 = arith.constant 3.200000e+01 : f32
    %135 = vector.broadcast %cst_67 : f32 to vector<8x1xf32>
    %136 = arith.divf %134, %135 : vector<8x1xf32>
    %137 = vector.broadcast %136 : vector<8x1xf32> to vector<8x32xf32>
    %138 = arith.subf %130, %137 : vector<8x32xf32>
    %139 = arith.mulf %138, %138 : vector<8x32xf32>
    %cst_68 = arith.constant dense<0.000000e+00> : vector<8xf32>
    %140 = vector.multi_reduction <add>, %139, %cst_68 [1] : vector<8x32xf32> to vector<8xf32>
    %141 = vector.shape_cast %140 : vector<8xf32> to vector<8x1xf32>
    %cst_69 = arith.constant 3.200000e+01 : f32
    %142 = vector.broadcast %cst_69 : f32 to vector<8x1xf32>
    %143 = arith.divf %141, %142 : vector<8x1xf32>
    %144 = vector.broadcast %136 : vector<8x1xf32> to vector<8x32xf32>
    %145 = arith.subf %130, %144 : vector<8x32xf32>
    %cst_70 = arith.constant 9.99999974E-6 : f32
    %146 = vector.broadcast %cst_70 : f32 to vector<8x1xf32>
    %147 = arith.addf %143, %146 : vector<8x1xf32>
    %148 = math.rsqrt %147 : vector<8x1xf32>
    %149 = vector.broadcast %148 : vector<8x1xf32> to vector<8x32xf32>
    %150 = arith.mulf %145, %149 : vector<8x32xf32>
    %151 = vector.broadcast %131 : vector<1x32xf32> to vector<8x32xf32>
    %152 = arith.mulf %150, %151 : vector<8x32xf32>
    %153 = vector.broadcast %132 : vector<1x32xf32> to vector<8x32xf32>
    %154 = arith.addf %152, %153 : vector<8x32xf32>
    %c0_71 = arith.constant 0 : index
    %c0_72 = arith.constant 0 : index
    %155 = vector.load %arg12[%c0_71, %c0_72] : memref<64x32xf32, #tpu.memory_space<vmem>>, vector<64x32xf32>
    %cst_73 = arith.constant dense<0.000000e+00> : vector<8x64xf32>
    %156 = tpu.matmul %154, %155, %cst_73 {dimension_numbers = #tpu.dot_dimension_numbers<[1], [1], [0], [0], [0, 0, 1, 0], [], []>} : vector<8x32xf32>, vector<64x32xf32>, vector<8x64xf32> -> vector<8x64xf32>
    %c0_74 = arith.constant 0 : index
    %c0_75 = arith.constant 0 : index
    %157 = vector.load %arg13[%c0_74, %c0_75] : memref<1x64xf32, #tpu.memory_space<vmem>>, vector<1x64xf32>
    %158 = vector.broadcast %157 : vector<1x64xf32> to vector<8x64xf32>
    %159 = arith.addf %156, %158 : vector<8x64xf32>
    %cst_76 = arith.constant 0.000000e+00 : f32
    %160 = vector.broadcast %cst_76 : f32 to vector<8x64xf32>
    %161 = arith.maximumf %159, %160 : vector<8x64xf32>
    %c0_77 = arith.constant 0 : index
    %c0_78 = arith.constant 0 : index
    %162 = vector.load %arg14[%c0_77, %c0_78] : memref<32x64xf32, #tpu.memory_space<vmem>>, vector<32x64xf32>
    %cst_79 = arith.constant dense<0.000000e+00> : vector<8x32xf32>
    %163 = tpu.matmul %161, %162, %cst_79 {dimension_numbers = #tpu.dot_dimension_numbers<[1], [1], [0], [0], [0, 0, 1, 0], [], []>} : vector<8x64xf32>, vector<32x64xf32>, vector<8x32xf32> -> vector<8x32xf32>
    %c0_80 = arith.constant 0 : index
    %c0_81 = arith.constant 0 : index
    %164 = vector.load %arg15[%c0_80, %c0_81] : memref<1x32xf32, #tpu.memory_space<vmem>>, vector<1x32xf32>
    %165 = vector.broadcast %164 : vector<1x32xf32> to vector<8x32xf32>
    %166 = arith.addf %163, %165 : vector<8x32xf32>
    %167 = arith.addf %166, %130 : vector<8x32xf32>
    %c0_82 = arith.constant 0 : index
    %c0_83 = arith.constant 0 : index
    %168 = vector.load %arg16[%c0_82, %c0_83] : memref<1x32xf32, #tpu.memory_space<vmem>>, vector<1x32xf32>
    %c0_84 = arith.constant 0 : index
    %c0_85 = arith.constant 0 : index
    %169 = vector.load %arg17[%c0_84, %c0_85] : memref<1x32xf32, #tpu.memory_space<vmem>>, vector<1x32xf32>
    %cst_86 = arith.constant dense<0.000000e+00> : vector<8xf32>
    %170 = vector.multi_reduction <add>, %167, %cst_86 [1] : vector<8x32xf32> to vector<8xf32>
    %171 = vector.shape_cast %170 : vector<8xf32> to vector<8x1xf32>
    %cst_87 = arith.constant 3.200000e+01 : f32
    %172 = vector.broadcast %cst_87 : f32 to vector<8x1xf32>
    %173 = arith.divf %171, %172 : vector<8x1xf32>
    %174 = vector.broadcast %173 : vector<8x1xf32> to vector<8x32xf32>
    %175 = arith.subf %167, %174 : vector<8x32xf32>
    %176 = arith.mulf %175, %175 : vector<8x32xf32>
    %cst_88 = arith.constant dense<0.000000e+00> : vector<8xf32>
    %177 = vector.multi_reduction <add>, %176, %cst_88 [1] : vector<8x32xf32> to vector<8xf32>
    %178 = vector.shape_cast %177 : vector<8xf32> to vector<8x1xf32>
    %cst_89 = arith.constant 3.200000e+01 : f32
    %179 = vector.broadcast %cst_89 : f32 to vector<8x1xf32>
    %180 = arith.divf %178, %179 : vector<8x1xf32>
    %181 = vector.broadcast %173 : vector<8x1xf32> to vector<8x32xf32>
    %182 = arith.subf %167, %181 : vector<8x32xf32>
    %cst_90 = arith.constant 9.99999974E-6 : f32
    %183 = vector.broadcast %cst_90 : f32 to vector<8x1xf32>
    %184 = arith.addf %180, %183 : vector<8x1xf32>
    %185 = math.rsqrt %184 : vector<8x1xf32>
    %186 = vector.broadcast %185 : vector<8x1xf32> to vector<8x32xf32>
    %187 = arith.mulf %182, %186 : vector<8x32xf32>
    %188 = vector.broadcast %168 : vector<1x32xf32> to vector<8x32xf32>
    %189 = arith.mulf %187, %188 : vector<8x32xf32>
    %190 = vector.broadcast %169 : vector<1x32xf32> to vector<8x32xf32>
    %191 = arith.addf %189, %190 : vector<8x32xf32>
    %c0_91 = arith.constant 0 : index
    %c0_92 = arith.constant 0 : index
    %c0_93 = arith.constant 0 : index
    %192 = vector.load %arg18[%c0_91, %c0_92, %c0_93] : memref<1x8x32xf32, #tpu.memory_space<vmem>>, vector<1x8x32xf32>
    %193 = vector.shape_cast %192 : vector<1x8x32xf32> to vector<8x32xf32>
    %194 = vector.shape_cast %191 : vector<8x32xf32> to vector<1x8x32xf32>
    tpu.vector_store %arg18[%c0_91, %c0_92, %c0_93], %194 {strides = array<i32>} : memref<1x8x32xf32, #tpu.memory_space<vmem>>, vector<1x8x32xf32>,
    return
  }
  func.func @transform_0(%arg0: i32) -> (i32, i32, i32) {
    %c0_i32 = arith.constant 0 : i32
    %c0_i32_0 = arith.constant 0 : i32
    %c0_i32_1 = arith.constant 0 : i32
    return %arg0, %c0_i32, %c0_i32_0 : i32, i32, i32
  }
  func.func @transform_1(%arg0: i32) -> (i32, i32, i32) {
    %c0_i32 = arith.constant 0 : i32
    %c0_i32_0 = arith.constant 0 : i32
    %c0_i32_1 = arith.constant 0 : i32
    return %arg0, %c0_i32, %c0_i32_0 : i32, i32, i32
  }
  func.func @transform_2(%arg0: i32) -> (i32, i32) {
    %c0_i32 = arith.constant 0 : i32
    %c0_i32_0 = arith.constant 0 : i32
    %c0_i32_1 = arith.constant 0 : i32
    return %c0_i32, %c0_i32_0 : i32, i32
  }
  func.func @transform_3(%arg0: i32) -> (i32, i32) {
    %c0_i32 = arith.constant 0 : i32
    %c0_i32_0 = arith.constant 0 : i32
    %c0_i32_1 = arith.constant 0 : i32
    return %c0_i32, %c0_i32_0 : i32, i32
  }
  func.func @transform_4(%arg0: i32) -> (i32, i32) {
    %c0_i32 = arith.constant 0 : i32
    %c0_i32_0 = arith.constant 0 : i32
    %c0_i32_1 = arith.constant 0 : i32
    return %c0_i32, %c0_i32_0 : i32, i32
  }
  func.func @transform_5(%arg0: i32) -> (i32, i32) {
    %c0_i32 = arith.constant 0 : i32
    %c0_i32_0 = arith.constant 0 : i32
    %c0_i32_1 = arith.constant 0 : i32
    return %c0_i32, %c0_i32_0 : i32, i32
  }
  func.func @transform_6(%arg0: i32) -> (i32, i32) {
    %c0_i32 = arith.constant 0 : i32
    %c0_i32_0 = arith.constant 0 : i32
    %c0_i32_1 = arith.constant 0 : i32
    return %c0_i32, %c0_i32_0 : i32, i32
  }
  func.func @transform_7(%arg0: i32) -> (i32, i32) {
    %c0_i32 = arith.constant 0 : i32
    %c0_i32_0 = arith.constant 0 : i32
    %c0_i32_1 = arith.constant 0 : i32
    return %c0_i32, %c0_i32_0 : i32, i32
  }
  func.func @transform_8(%arg0: i32) -> (i32, i32) {
    %c0_i32 = arith.constant 0 : i32
    %c0_i32_0 = arith.constant 0 : i32
    %c0_i32_1 = arith.constant 0 : i32
    return %c0_i32, %c0_i32_0 : i32, i32
  }
  func.func @transform_9(%arg0: i32) -> (i32, i32) {
    %c0_i32 = arith.constant 0 : i32
    %c0_i32_0 = arith.constant 0 : i32
    %c0_i32_1 = arith.constant 0 : i32
    return %c0_i32, %c0_i32_0 : i32, i32
  }
  func.func @transform_10(%arg0: i32) -> (i32, i32) {
    %c0_i32 = arith.constant 0 : i32
    %c0_i32_0 = arith.constant 0 : i32
    %c0_i32_1 = arith.constant 0 : i32
    return %c0_i32, %c0_i32_0 : i32, i32
  }
  func.func @transform_11(%arg0: i32) -> (i32, i32) {
    %c0_i32 = arith.constant 0 : i32
    %c0_i32_0 = arith.constant 0 : i32
    %c0_i32_1 = arith.constant 0 : i32
    return %c0_i32, %c0_i32_0 : i32, i32
  }
  func.func @transform_12(%arg0: i32) -> (i32, i32) {
    %c0_i32 = arith.constant 0 : i32
    %c0_i32_0 = arith.constant 0 : i32
    %c0_i32_1 = arith.constant 0 : i32
    return %c0_i32, %c0_i32_0 : i32, i32
  }
  func.func @transform_13(%arg0: i32) -> (i32, i32) {
    %c0_i32 = arith.constant 0 : i32
    %c0_i32_0 = arith.constant 0 : i32
    %c0_i32_1 = arith.constant 0 : i32
    return %c0_i32, %c0_i32_0 : i32, i32
  }
  func.func @transform_14(%arg0: i32) -> (i32, i32) {
    %c0_i32 = arith.constant 0 : i32
    %c0_i32_0 = arith.constant 0 : i32
    %c0_i32_1 = arith.constant 0 : i32
    return %c0_i32, %c0_i32_0 : i32, i32
  }
  func.func @transform_15(%arg0: i32) -> (i32, i32) {
    %c0_i32 = arith.constant 0 : i32
    %c0_i32_0 = arith.constant 0 : i32
    %c0_i32_1 = arith.constant 0 : i32
    return %c0_i32, %c0_i32_0 : i32, i32
  }
  func.func @transform_16(%arg0: i32) -> (i32, i32) {
    %c0_i32 = arith.constant 0 : i32
    %c0_i32_0 = arith.constant 0 : i32
    %c0_i32_1 = arith.constant 0 : i32
    return %c0_i32, %c0_i32_0 : i32, i32
  }
  func.func @transform_17(%arg0: i32) -> (i32, i32, i32) {
    %c0_i32 = arith.constant 0 : i32
    %c0_i32_0 = arith.constant 0 : i32
    %c0_i32_1 = arith.constant 0 : i32
    return %arg0, %c0_i32, %c0_i32_0 : i32, i32, i32
  }
}

</mosaic_0001>

<llo_original>
// kernel: tpu_custom_call.1
$region0: #{tpu_custom_call.1}
  #allocation0 [shape = 'u32[]', space=smem, size = 0x4, offset = 0x4, fixed_abs, tag = 'smem constant byte address 0x4 - core index']
  #allocation1 [shape = 'u32[144,128]{1,0:T(1,128)}', space=vmem, size = 0x12000, scoped, tag = 'internal scratch']
  %s0 = inlined_call_operand.hbm [shape: f32[2,8,32], index: 0, kind: input, shape index: {}]
  %s1 = inlined_call_operand.hbm [shape: f32[2,8,8], index: 1, kind: input, shape index: {}]
  %s2 = inlined_call_operand.vmem [shape: f32[32,32], index: 2, kind: input, shape index: {}]
  %s3 = inlined_call_operand.vmem [shape: f32[32,32], index: 3, kind: input, shape index: {}]
  %s4 = inlined_call_operand.vmem [shape: f32[32,32], index: 4, kind: input, shape index: {}]
  %s5 = inlined_call_operand.hbm [shape: f32[32,32], index: 5, kind: input, shape index: {}]
  %s6 = inlined_call_operand.vmem [shape: f32[1,32], index: 6, kind: input, shape index: {}]
  %s7 = inlined_call_operand.vmem [shape: f32[1,32], index: 7, kind: input, shape index: {}]
  %s8 = inlined_call_operand.vmem [shape: f32[1,32], index: 8, kind: input, shape index: {}]
  %s9 = inlined_call_operand.vmem [shape: f32[1,32], index: 9, kind: input, shape index: {}]
  %s10 = inlined_call_operand.vmem [shape: f32[1,32], index: 10, kind: input, shape index: {}]
  %s11 = inlined_call_operand.vmem [shape: f32[64,32], index: 11, kind: input, shape index: {}]
  %s12 = inlined_call_operand.vmem [shape: f32[1,64], index: 12, kind: input, shape index: {}]
  %s13 = inlined_call_operand.hbm [shape: f32[32,64], index: 13, kind: input, shape index: {}]
  %s14 = inlined_call_operand.vmem [shape: f32[1,32], index: 14, kind: input, shape index: {}]
  %s15 = inlined_call_operand.vmem [shape: f32[1,32], index: 15, kind: input, shape index: {}]
  %s16 = inlined_call_operand.vmem [shape: f32[1,32], index: 16, kind: input, shape index: {}]
  %s17 = inlined_call_operand.hbm [shape: f32[2,8,32], index: 17, kind: output, shape index: {}]
  %s18 = sld [smem:[#allocation0]]
  $region117: #{tpu_custom_call.1} parent=0
    _
  %s20 = ssub.s32 1, %s18
  %s21 = scalar_select 0, %s20, %s18
  $region1: #{tpu_custom_call.1} parent=0
    #allocation2 [shape = 'u8[8192]{0}', space=vmem, size = 0x2000, scoped, tag = 'input window, operand 0']
    #allocation3 [shape = 's32[2]{0}', space=sflag, size = 0x8, scoped, tag = 'scoped memory for tpu_custom_call.1']
    #allocation4 [shape = 's32[2]{0}', space=sflag, size = 0x8, scoped, tag = 'scoped memory for tpu_custom_call.1']
    #allocation5 [shape = 'u8[8192]{0}', space=vmem, size = 0x2000, scoped, tag = 'input window, operand 1']
    #allocation6 [shape = 's32[2]{0}', space=sflag, size = 0x8, scoped, tag = 'scoped memory for tpu_custom_call.1']
    #allocation7 [shape = 'u8[16384]{0}', space=vmem, size = 0x4000, scoped, tag = 'input window, operand 5, single buffered']
    #allocation8 [shape = 'u8[16384]{0}', space=vmem, size = 0x4000, scoped, tag = 'input window, operand 13, single buffered']
    #allocation9 [shape = 's32[1]{0}', space=sflag, size = 0x4, scoped, tag = 'scoped memory for tpu_custom_call.1']
    #allocation10 [shape = 'u8[8192]{0}', space=vmem, size = 0x2000, scoped, tag = 'output window, operand 0']
    %22 = vsyncpa [#allocation3], 0
    %s23 = scalar_lea.sflag [#allocation3], 1
    %24 = vsyncpa %s23, 0
    %25 = vsyncpa [#allocation6], 0
    %s26 = scalar_lea.sflag [#allocation6], 1
    %27 = vsyncpa %s26, 0
    %28 = vsyncpa [#allocation9], 0
    %29 = vsyncpa [#allocation4], 0
    %s30 = scalar_lea.sflag [#allocation4], 1
    %31 = vsyncpa %s30, 0
    loop: start=0, step=1, limit=4
    $region2: #{tpu_custom_call.1} parent=1 // loop_pre_header
      _
    $region3: #{tpu_custom_call.1} parent=1 // loop_header
      %s33 = sphi 0, %s37
      %p34 = scmp.ge.s32.totalorder %s33, 4
      %s43 = sphi 0, %s45
      %s46 = sphi 0, %s43
      %s47 = sphi 0, %s46
      %s63 = sphi 0, %s47
      %s69 = sphi 0, %s71
      %s72 = sphi 0, %s69
      %s73 = sphi 0, %s72
      %s89 = sphi 0, %s73
      %s93 = sphi 0, %s93
      %s95 = sphi 0, %s93
      %s96 = sphi 0, %s95
      %s110 = sphi 0, %s96
      %s114 = sphi 0, %s114
      %s116 = sphi 0, %s114
      %s117 = sphi 0, %s116
      %s131 = sphi 0, %s117
      %s135 = sphi 0, %s135
      %s137 = sphi 0, %s135
      %s138 = sphi 0, %s137
      %s152 = sphi 0, %s138
      %s156 = sphi 0, %s156
      %s158 = sphi 0, %s156
      %s159 = sphi 0, %s158
      %s173 = sphi 0, %s159
      %s177 = sphi 0, %s177
      %s179 = sphi 0, %s177
      %s180 = sphi 0, %s179
      %s194 = sphi 0, %s180
      %s198 = sphi 0, %s198
      %s200 = sphi 0, %s198
      %s201 = sphi 0, %s200
      %s215 = sphi 0, %s201
      %s219 = sphi 0, %s219
      %s221 = sphi 0, %s219
      %s222 = sphi 0, %s221
      %s236 = sphi 0, %s222
      %s240 = sphi 0, %s240
      %s242 = sphi 0, %s240
      %s243 = sphi 0, %s242
      %s257 = sphi 0, %s243
      %s261 = sphi 0, %s261
      %s263 = sphi 0, %s261
      %s264 = sphi 0, %s263
      %s278 = sphi 0, %s264
      %s282 = sphi 0, %s282
      %s284 = sphi 0, %s282
      %s285 = sphi 0, %s284
      %s299 = sphi 0, %s285
      %s303 = sphi 0, %s303
      %s305 = sphi 0, %s303
      %s306 = sphi 0, %s305
      %s320 = sphi 0, %s306
      %s324 = sphi 0, %s324
      %s326 = sphi 0, %s324
      %s327 = sphi 0, %s326
      %s341 = sphi 0, %s327
      %s345 = sphi 0, %s345
      %s347 = sphi 0, %s345
      %s348 = sphi 0, %s347
      %s362 = sphi 0, %s348
      %s366 = sphi 0, %s366
      %s368 = sphi 0, %s366
      %s369 = sphi 0, %s368
      %s383 = sphi 0, %s369
      %s387 = sphi 0, %s387
      %s389 = sphi 0, %s387
      %s390 = sphi 0, %s389
      %s404 = sphi 0, %s390
      %s410 = sphi 0, %s412
      %s413 = sphi 0, %s410
      %s414 = sphi 0, %s413
      %s430 = sphi 0, %s414
    $region4: #{tpu_custom_call.1} parent=1 // loop_header_branch
      %36 = sbr.rel (%p34) target = $region8
    $region5: #{tpu_custom_call.1} parent=1 // loop_body
      %s38 = ssub.s32 %s33, 1
      %s39 = ssub.s32 %s33, 2
      %s40 = sadd.s32 %s33, 1
      %s41 = ssub.s32 %s33, %s40
      %p42 = scmp.eq.s32.totalorder %s41, 0
      %s44 = sadd.s32 %s43, 1
      %s45 = scalar_select %p42, %s43, %s44
      %p48 = pneg %p42
      %p49 = scmp.eq.s32.totalorder %s33, 1
      %p50 = por %p48, %p49
      %p51 = scmp.ne.s32.totalorder %s43, %s46
      %p52 = scmp.eq.s32.totalorder %s33, 0
      %p53 = por %p51, %p52
      %p54 = scmp.ne.s32.totalorder %s43, %s46
      %p55 = scmp.eq.s32.totalorder %s38, 1
      %p56 = por %p54, %p55
      %p57 = scmp.ne.s32.totalorder %s46, %s47
      %p58 = scmp.eq.s32.totalorder %s38, 0
      %p59 = por %p57, %p58
      %p60 = scmp.ne.s32.totalorder %s46, %s47
      %p61 = scmp.eq.s32.totalorder %s39, 1
      %p62 = por %p60, %p61
      %p64 = scmp.ne.s32.totalorder %s47, %s63
      %p65 = scmp.eq.s32.totalorder %s39, 0
      %p66 = por %p64, %p65
      %s67 = ssub.s32 %s33, %s40
      %p68 = scmp.eq.s32.totalorder %s67, 0
      %s70 = sadd.s32 %s69, 1
      %s71 = scalar_select %p68, %s69, %s70
      %p74 = pneg %p68
      %p75 = scmp.eq.s32.totalorder %s33, 1
      %p76 = por %p74, %p75
      %p77 = scmp.ne.s32.totalorder %s69, %s72
      %p78 = scmp.eq.s32.totalorder %s33, 0
      %p79 = por %p77, %p78
      %p80 = scmp.ne.s32.totalorder %s69, %s72
      %p81 = scmp.eq.s32.totalorder %s38, 1
      %p82 = por %p80, %p81
      %p83 = scmp.ne.s32.totalorder %s72, %s73
      %p84 = scmp.eq.s32.totalorder %s38, 0
      %p85 = por %p83, %p84
      %p86 = scmp.ne.s32.totalorder %s72, %s73
      %p87 = scmp.eq.s32.totalorder %s39, 1
      %p88 = por %p86, %p87
      %p90 = scmp.ne.s32.totalorder %s73, %s89
      %p91 = scmp.eq.s32.totalorder %s39, 0
      %p92 = por %p90, %p91
      %s94 = sadd.s32 %s93, 1
      %p97 = scmp.eq.s32.totalorder %s33, 1
      %p98 = scmp.ne.s32.totalorder %s93, %s95
      %p99 = scmp.eq.s32.totalorder %s33, 0
      %p100 = por %p98, %p99
      %p101 = scmp.ne.s32.totalorder %s93, %s95
      %p102 = scmp.eq.s32.totalorder %s38, 1
      %p103 = por %p101, %p102
      %p104 = scmp.ne.s32.totalorder %s95, %s96
      %p105 = scmp.eq.s32.totalorder %s38, 0
      %p106 = por %p104, %p105
      %p107 = scmp.ne.s32.totalorder %s95, %s96
      %p108 = scmp.eq.s32.totalorder %s39, 1
      %p109 = por %p107, %p108
      %p111 = scmp.ne.s32.totalorder %s96, %s110
      %p112 = scmp.eq.s32.totalorder %s39, 0
      %p113 = por %p111, %p112
      %s115 = sadd.s32 %s114, 1
      %p118 = scmp.eq.s32.totalorder %s33, 1
      %p119 = scmp.ne.s32.totalorder %s114, %s116
      %p120 = scmp.eq.s32.totalorder %s33, 0
      %p121 = por %p119, %p120
      %p122 = scmp.ne.s32.totalorder %s114, %s116
      %p123 = scmp.eq.s32.totalorder %s38, 1
      %p124 = por %p122, %p123
      %p125 = scmp.ne.s32.totalorder %s116, %s117
      %p126 = scmp.eq.s32.totalorder %s38, 0
      %p127 = por %p125, %p126
      %p128 = scmp.ne.s32.totalorder %s116, %s117
      %p129 = scmp.eq.s32.totalorder %s39, 1
      %p130 = por %p128, %p129
      %p132 = scmp.ne.s32.totalorder %s117, %s131
      %p133 = scmp.eq.s32.totalorder %s39, 0
      %p134 = por %p132, %p133
      %s136 = sadd.s32 %s135, 1
      %p139 = scmp.eq.s32.totalorder %s33, 1
      %p140 = scmp.ne.s32.totalorder %s135, %s137
      %p141 = scmp.eq.s32.totalorder %s33, 0
      %p142 = por %p140, %p141
      %p143 = scmp.ne.s32.totalorder %s135, %s137
      %p144 = scmp.eq.s32.totalorder %s38, 1
      %p145 = por %p143, %p144
      %p146 = scmp.ne.s32.totalorder %s137, %s138
      %p147 = scmp.eq.s32.totalorder %s38, 0
      %p148 = por %p146, %p147
      %p149 = scmp.ne.s32.totalorder %s137, %s138
      %p150 = scmp.eq.s32.totalorder %s39, 1
      %p151 = por %p149, %p150
      %p153 = scmp.ne.s32.totalorder %s138, %s152
      %p154 = scmp.eq.s32.totalorder %s39, 0
      %p155 = por %p153, %p154
      %s157 = sadd.s32 %s156, 1
      %p160 = scmp.eq.s32.totalorder %s33, 1
      %p161 = scmp.ne.s32.totalorder %s156, %s158
      %p162 = scmp.eq.s32.totalorder %s33, 0
      %p163 = por %p161, %p162
      %p164 = scmp.ne.s32.totalorder %s156, %s158
      %p165 = scmp.eq.s32.totalorder %s38, 1
      %p166 = por %p164, %p165
      %p167 = scmp.ne.s32.totalorder %s158, %s159
      %p168 = scmp.eq.s32.totalorder %s38, 0
      %p169 = por %p167, %p168
      %p170 = scmp.ne.s32.totalorder %s158, %s159
      %p171 = scmp.eq.s32.totalorder %s39, 1
      %p172 = por %p170, %p171
      %p174 = scmp.ne.s32.totalorder %s159, %s173
      %p175 = scmp.eq.s32.totalorder %s39, 0
      %p176 = por %p174, %p175
      %s178 = sadd.s32 %s177, 1
      %p181 = scmp.eq.s32.totalorder %s33, 1
      %p182 = scmp.ne.s32.totalorder %s177, %s179
      %p183 = scmp.eq.s32.totalorder %s33, 0
      %p184 = por %p182, %p183
      %p185 = scmp.ne.s32.totalorder %s177, %s179
      %p186 = scmp.eq.s32.totalorder %s38, 1
      %p187 = por %p185, %p186
      %p188 = scmp.ne.s32.totalorder %s179, %s180
      %p189 = scmp.eq.s32.totalorder %s38, 0
      %p190 = por %p188, %p189
      %p191 = scmp.ne.s32.totalorder %s179, %s180
      %p192 = scmp.eq.s32.totalorder %s39, 1
      %p193 = por %p191, %p192
      %p195 = scmp.ne.s32.totalorder %s180, %s194
      %p196 = scmp.eq.s32.totalorder %s39, 0
      %p197 = por %p195, %p196
      %s199 = sadd.s32 %s198, 1
      %p202 = scmp.eq.s32.totalorder %s33, 1
      %p203 = scmp.ne.s32.totalorder %s198, %s200
      %p204 = scmp.eq.s32.totalorder %s33, 0
      %p205 = por %p203, %p204
      %p206 = scmp.ne.s32.totalorder %s198, %s200
      %p207 = scmp.eq.s32.totalorder %s38, 1
      %p208 = por %p206, %p207
      %p209 = scmp.ne.s32.totalorder %s200, %s201
      %p210 = scmp.eq.s32.totalorder %s38, 0
      %p211 = por %p209, %p210
      %p212 = scmp.ne.s32.totalorder %s200, %s201
      %p213 = scmp.eq.s32.totalorder %s39, 1
      %p214 = por %p212, %p213
      %p216 = scmp.ne.s32.totalorder %s201, %s215
      %p217 = scmp.eq.s32.totalorder %s39, 0
      %p218 = por %p216, %p217
      %s220 = sadd.s32 %s219, 1
      %p223 = scmp.eq.s32.totalorder %s33, 1
      %p224 = scmp.ne.s32.totalorder %s219, %s221
      %p225 = scmp.eq.s32.totalorder %s33, 0
      %p226 = por %p224, %p225
      %p227 = scmp.ne.s32.totalorder %s219, %s221
      %p228 = scmp.eq.s32.totalorder %s38, 1
      %p229 = por %p227, %p228
      %p230 = scmp.ne.s32.totalorder %s221, %s222
      %p231 = scmp.eq.s32.totalorder %s38, 0
      %p232 = por %p230, %p231
      %p233 = scmp.ne.s32.totalorder %s221, %s222
      %p234 = scmp.eq.s32.totalorder %s39, 1
      %p235 = por %p233, %p234
      %p237 = scmp.ne.s32.totalorder %s222, %s236
      %p238 = scmp.eq.s32.totalorder %s39, 0
      %p239 = por %p237, %p238
      %s241 = sadd.s32 %s240, 1
      %p244 = scmp.eq.s32.totalorder %s33, 1
      %p245 = scmp.ne.s32.totalorder %s240, %s242
      %p246 = scmp.eq.s32.totalorder %s33, 0
      %p247 = por %p245, %p246
      %p248 = scmp.ne.s32.totalorder %s240, %s242
      %p249 = scmp.eq.s32.totalorder %s38, 1
      %p250 = por %p248, %p249
      %p251 = scmp.ne.s32.totalorder %s242, %s243
      %p252 = scmp.eq.s32.totalorder %s38, 0
      %p253 = por %p251, %p252
      %p254 = scmp.ne.s32.totalorder %s242, %s243
      %p255 = scmp.eq.s32.totalorder %s39, 1
      %p256 = por %p254, %p255
      %p258 = scmp.ne.s32.totalorder %s243, %s257
      %p259 = scmp.eq.s32.totalorder %s39, 0
      %p260 = por %p258, %p259
      %s262 = sadd.s32 %s261, 1
      %p265 = scmp.eq.s32.totalorder %s33, 1
      %p266 = scmp.ne.s32.totalorder %s261, %s263
      %p267 = scmp.eq.s32.totalorder %s33, 0
      %p268 = por %p266, %p267
      %p269 = scmp.ne.s32.totalorder %s261, %s263
      %p270 = scmp.eq.s32.totalorder %s38, 1
      %p271 = por %p269, %p270
      %p272 = scmp.ne.s32.totalorder %s263, %s264
      %p273 = scmp.eq.s32.totalorder %s38, 0
      %p274 = por %p272, %p273
      %p275 = scmp.ne.s32.totalorder %s263, %s264
      %p276 = scmp.eq.s32.totalorder %s39, 1
      %p277 = por %p275, %p276
      %p279 = scmp.ne.s32.totalorder %s264, %s278
      %p280 = scmp.eq.s32.totalorder %s39, 0
      %p281 = por %p279, %p280
      %s283 = sadd.s32 %s282, 1
      %p286 = scmp.eq.s32.totalorder %s33, 1
      %p287 = scmp.ne.s32.totalorder %s282, %s284
      %p288 = scmp.eq.s32.totalorder %s33, 0
      %p289 = por %p287, %p288
      %p290 = scmp.ne.s32.totalorder %s282, %s284
      %p291 = scmp.eq.s32.totalorder %s38, 1
      %p292 = por %p290, %p291
      %p293 = scmp.ne.s32.totalorder %s284, %s285
      %p294 = scmp.eq.s32.totalorder %s38, 0
      %p295 = por %p293, %p294
      %p296 = scmp.ne.s32.totalorder %s284, %s285
      %p297 = scmp.eq.s32.totalorder %s39, 1
      %p298 = por %p296, %p297
      %p300 = scmp.ne.s32.totalorder %s285, %s299
      %p301 = scmp.eq.s32.totalorder %s39, 0
      %p302 = por %p300, %p301
      %s304 = sadd.s32 %s303, 1
      %p307 = scmp.eq.s32.totalorder %s33, 1
      %p308 = scmp.ne.s32.totalorder %s303, %s305
      %p309 = scmp.eq.s32.totalorder %s33, 0
      %p310 = por %p308, %p309
      %p311 = scmp.ne.s32.totalorder %s303, %s305
      %p312 = scmp.eq.s32.totalorder %s38, 1
      %p313 = por %p311, %p312
      %p314 = scmp.ne.s32.totalorder %s305, %s306
      %p315 = scmp.eq.s32.totalorder %s38, 0
      %p316 = por %p314, %p315
      %p317 = scmp.ne.s32.totalorder %s305, %s306
      %p318 = scmp.eq.s32.totalorder %s39, 1
      %p319 = por %p317, %p318
      %p321 = scmp.ne.s32.totalorder %s306, %s320
      %p322 = scmp.eq.s32.totalorder %s39, 0
      %p323 = por %p321, %p322
      %s325 = sadd.s32 %s324, 1
      %p328 = scmp.eq.s32.totalorder %s33, 1
      %p329 = scmp.ne.s32.totalorder %s324, %s326
      %p330 = scmp.eq.s32.totalorder %s33, 0
      %p331 = por %p329, %p330
      %p332 = scmp.ne.s32.totalorder %s324, %s326
      %p333 = scmp.eq.s32.totalorder %s38, 1
      %p334 = por %p332, %p333
      %p335 = scmp.ne.s32.totalorder %s326, %s327
      %p336 = scmp.eq.s32.totalorder %s38, 0
      %p337 = por %p335, %p336
      %p338 = scmp.ne.s32.totalorder %s326, %s327
      %p339 = scmp.eq.s32.totalorder %s39, 1
      %p340 = por %p338, %p339
      %p342 = scmp.ne.s32.totalorder %s327, %s341
      %p343 = scmp.eq.s32.totalorder %s39, 0
      %p344 = por %p342, %p343
      %s346 = sadd.s32 %s345, 1
      %p349 = scmp.eq.s32.totalorder %s33, 1
      %p350 = scmp.ne.s32.totalorder %s345, %s347
      %p351 = scmp.eq.s32.totalorder %s33, 0
      %p352 = por %p350, %p351
      %p353 = scmp.ne.s32.totalorder %s345, %s347
      %p354 = scmp.eq.s32.totalorder %s38, 1
      %p355 = por %p353, %p354
      %p356 = scmp.ne.s32.totalorder %s347, %s348
      %p357 = scmp.eq.s32.totalorder %s38, 0
      %p358 = por %p356, %p357
      %p359 = scmp.ne.s32.totalorder %s347, %s348
      %p360 = scmp.eq.s32.totalorder %s39, 1
      %p361 = por %p359, %p360
      %p363 = scmp.ne.s32.totalorder %s348, %s362
      %p364 = scmp.eq.s32.totalorder %s39, 0
      %p365 = por %p363, %p364
      %s367 = sadd.s32 %s366, 1
      %p370 = scmp.eq.s32.totalorder %s33, 1
      %p371 = scmp.ne.s32.totalorder %s366, %s368
      %p372 = scmp.eq.s32.totalorder %s33, 0
      %p373 = por %p371, %p372
      %p374 = scmp.ne.s32.totalorder %s366, %s368
      %p375 = scmp.eq.s32.totalorder %s38, 1
      %p376 = por %p374, %p375
      %p377 = scmp.ne.s32.totalorder %s368, %s369
      %p378 = scmp.eq.s32.totalorder %s38, 0
      %p379 = por %p377, %p378
      %p380 = scmp.ne.s32.totalorder %s368, %s369
      %p381 = scmp.eq.s32.totalorder %s39, 1
      %p382 = por %p380, %p381
      %p384 = scmp.ne.s32.totalorder %s369, %s383
      %p385 = scmp.eq.s32.totalorder %s39, 0
      %p386 = por %p384, %p385
      %s388 = sadd.s32 %s387, 1
      %p391 = scmp.eq.s32.totalorder %s33, 1
      %p392 = scmp.ne.s32.totalorder %s387, %s389
      %p393 = scmp.eq.s32.totalorder %s33, 0
      %p394 = por %p392, %p393
      %p395 = scmp.ne.s32.totalorder %s387, %s389
      %p396 = scmp.eq.s32.totalorder %s38, 1
      %p397 = por %p395, %p396
      %p398 = scmp.ne.s32.totalorder %s389, %s390
      %p399 = scmp.eq.s32.totalorder %s38, 0
      %p400 = por %p398, %p399
      %p401 = scmp.ne.s32.totalorder %s389, %s390
      %p402 = scmp.eq.s32.totalorder %s39, 1
      %p403 = por %p401, %p402
      %p405 = scmp.ne.s32.totalorder %s390, %s404
      %p406 = scmp.eq.s32.totalorder %s39, 0
      %p407 = por %p405, %p406
      %s408 = ssub.s32 %s33, %s40
      %p409 = scmp.eq.s32.totalorder %s408, 0
      %s411 = sadd.s32 %s410, 1
      %s412 = scalar_select %p409, %s410, %s411
      %p415 = pneg %p409
      %p416 = scmp.eq.s32.totalorder %s33, 1
      %p417 = por %p415, %p416
      %p418 = scmp.ne.s32.totalorder %s410, %s413
      %p419 = scmp.eq.s32.totalorder %s33, 0
      %p420 = por %p418, %p419
      %p421 = scmp.ne.s32.totalorder %s410, %s413
      %p422 = scmp.eq.s32.totalorder %s38, 1
      %p423 = por %p421, %p422
      %p424 = scmp.ne.s32.totalorder %s413, %s414
      %p425 = scmp.eq.s32.totalorder %s38, 0
      %p426 = por %p424, %p425
      %p427 = scmp.ne.s32.totalorder %s413, %s414
      %p428 = scmp.eq.s32.totalorder %s39, 1
      %p429 = por %p427, %p428
      %p431 = scmp.ne.s32.totalorder %s414, %s430
      %p432 = scmp.eq.s32.totalorder %s39, 0
      %p433 = por %p431, %p432
      %p434 = scmp.le.s32.totalorder 1, %s33
      %p435 = scmp.lt.s32.totalorder %s33, 3
      %p436 = pnand %p434, %p435
      %p437 = pneg %p436
      // Predicated region
      $region9: #{tpu_custom_call.1} parent=5 // pred_check
        _
      $region10: #{tpu_custom_call.1} parent=5 // pred_check_branch
        %439 = sbr.rel (%p436) target = $region12
      $region11: #{tpu_custom_call.1} parent=5 // pred_region
        %s440 = ssub.s32 %s33, 1
        // Predicated region
        $region13: #{tpu_custom_call.1} parent=11 // pred_check
          %p441 = pneg %p106
        $region14: #{tpu_custom_call.1} parent=11 // pred_check_branch
          %443 = sbr.rel (%p441) target = $region16
        $region15: #{tpu_custom_call.1} parent=11 // pred_region
          _
        $region16: #{tpu_custom_call.1} parent=11 // pred_fallthru
          _
        // Predicated region
        $region17: #{tpu_custom_call.1} parent=11 // pred_check
          %p444 = pneg %p127
        $region18: #{tpu_custom_call.1} parent=11 // pred_check_branch
          %446 = sbr.rel (%p444) target = $region20
        $region19: #{tpu_custom_call.1} parent=11 // pred_region
          _
        $region20: #{tpu_custom_call.1} parent=11 // pred_fallthru
          _
        // Predicated region
        $region21: #{tpu_custom_call.1} parent=11 // pred_check
          %p447 = pneg %p148
        $region22: #{tpu_custom_call.1} parent=11 // pred_check_branch
          %449 = sbr.rel (%p447) target = $region24
        $region23: #{tpu_custom_call.1} parent=11 // pred_region
          _
        $region24: #{tpu_custom_call.1} parent=11 // pred_fallthru
          _
        // Predicated region
        $region25: #{tpu_custom_call.1} parent=11 // pred_check
          %p450 = pneg %p169
        $region26: #{tpu_custom_call.1} parent=11 // pred_check_branch
          %452 = sbr.rel (%p450) target = $region28
        $region27: #{tpu_custom_call.1} parent=11 // pred_region
          %s454 = ssub.s32 512, 512
          %455 = vsyncadd [#allocation6], %s454
          %s456 = sshll.u32 [#allocation7], 4
          %s457 = int_to_ptr.vmem [resolvable:$true] %s456
          %462 = dma.hbm_to_vmem [thread:$0]  %s5, 512, %s457, [#allocation6], 128, 128, 8
        $region28: #{tpu_custom_call.1} parent=11 // pred_fallthru
          _
        // Predicated region
        $region29: #{tpu_custom_call.1} parent=11 // pred_check
          %p463 = pneg %p190
        $region30: #{tpu_custom_call.1} parent=11 // pred_check_branch
          %465 = sbr.rel (%p463) target = $region32
        $region31: #{tpu_custom_call.1} parent=11 // pred_region
          _
        $region32: #{tpu_custom_call.1} parent=11 // pred_fallthru
          _
        // Predicated region
        $region33: #{tpu_custom_call.1} parent=11 // pred_check
          %p466 = pneg %p211
        $region34: #{tpu_custom_call.1} parent=11 // pred_check_branch
          %468 = sbr.rel (%p466) target = $region36
        $region35: #{tpu_custom_call.1} parent=11 // pred_region
          _
        $region36: #{tpu_custom_call.1} parent=11 // pred_fallthru
          _
        // Predicated region
        $region37: #{tpu_custom_call.1} parent=11 // pred_check
          %p469 = pneg %p232
        $region38: #{tpu_custom_call.1} parent=11 // pred_check_branch
          %471 = sbr.rel (%p469) target = $region40
        $region39: #{tpu_custom_call.1} parent=11 // pred_region
          _
        $region40: #{tpu_custom_call.1} parent=11 // pred_fallthru
          _
        // Predicated region
        $region41: #{tpu_custom_call.1} parent=11 // pred_check
          %p472 = pneg %p253
        $region42: #{tpu_custom_call.1} parent=11 // pred_check_branch
          %474 = sbr.rel (%p472) target = $region44
        $region43: #{tpu_custom_call.1} parent=11 // pred_region
          _
        $region44: #{tpu_custom_call.1} parent=11 // pred_fallthru
          _
        // Predicated region
        $region45: #{tpu_custom_call.1} parent=11 // pred_check
          %p475 = pneg %p274
        $region46: #{tpu_custom_call.1} parent=11 // pred_check_branch
          %477 = sbr.rel (%p475) target = $region48
        $region47: #{tpu_custom_call.1} parent=11 // pred_region
          _
        $region48: #{tpu_custom_call.1} parent=11 // pred_fallthru
          _
        // Predicated region
        $region49: #{tpu_custom_call.1} parent=11 // pred_check
          %p478 = pneg %p295
        $region50: #{tpu_custom_call.1} parent=11 // pred_check_branch
          %480 = sbr.rel (%p478) target = $region52
        $region51: #{tpu_custom_call.1} parent=11 // pred_region
          _
        $region52: #{tpu_custom_call.1} parent=11 // pred_fallthru
          _
        // Predicated region
        $region53: #{tpu_custom_call.1} parent=11 // pred_check
          %p481 = pneg %p316
        $region54: #{tpu_custom_call.1} parent=11 // pred_check_branch
          %483 = sbr.rel (%p481) target = $region56
        $region55: #{tpu_custom_call.1} parent=11 // pred_region
          _
        $region56: #{tpu_custom_call.1} parent=11 // pred_fallthru
          _
        // Predicated region
        $region57: #{tpu_custom_call.1} parent=11 // pred_check
          %p484 = pneg %p337
        $region58: #{tpu_custom_call.1} parent=11 // pred_check_branch
          %486 = sbr.rel (%p484) target = $region60
        $region59: #{tpu_custom_call.1} parent=11 // pred_region
          %s488 = ssub.s32 512, 512
          %489 = vsyncadd [#allocation9], %s488
          %s490 = sshll.u32 [#allocation8], 4
          %s491 = int_to_ptr.vmem [resolvable:$true] %s490
          %496 = dma.hbm_to_vmem [thread:$0]  %s13, 512, %s491, [#allocation9], 128, 128, 8
        $region60: #{tpu_custom_call.1} parent=11 // pred_fallthru
          _
        // Predicated region
        $region61: #{tpu_custom_call.1} parent=11 // pred_check
          %p497 = pneg %p358
        $region62: #{tpu_custom_call.1} parent=11 // pred_check_branch
          %499 = sbr.rel (%p497) target = $region64
        $region63: #{tpu_custom_call.1} parent=11 // pred_region
          _
        $region64: #{tpu_custom_call.1} parent=11 // pred_fallthru
          _
        // Predicated region
        $region65: #{tpu_custom_call.1} parent=11 // pred_check
          %p500 = pneg %p379
        $region66: #{tpu_custom_call.1} parent=11 // pred_check_branch
          %502 = sbr.rel (%p500) target = $region68
        $region67: #{tpu_custom_call.1} parent=11 // pred_region
          _
        $region68: #{tpu_custom_call.1} parent=11 // pred_fallthru
          _
        // Predicated region
        $region69: #{tpu_custom_call.1} parent=11 // pred_check
          %p503 = pneg %p400
        $region70: #{tpu_custom_call.1} parent=11 // pred_check_branch
          %505 = sbr.rel (%p503) target = $region72
        $region71: #{tpu_custom_call.1} parent=11 // pred_region
          _
        $region72: #{tpu_custom_call.1} parent=11 // pred_fallthru
          _
      $region12: #{tpu_custom_call.1} parent=5 // pred_fallthru
        _
      %p506 = scmp.lt.s32.totalorder %s33, 2
      // Predicated region
      $region73: #{tpu_custom_call.1} parent=5 // pred_check
        %p507 = pneg %p506
      $region74: #{tpu_custom_call.1} parent=5 // pred_check_branch
        %509 = sbr.rel (%p507) target = $region76
      $region75: #{tpu_custom_call.1} parent=5 // pred_region
        // Predicated region
        $region77: #{tpu_custom_call.1} parent=75 // pred_check
          %p510 = pneg %p53
        $region78: #{tpu_custom_call.1} parent=75 // pred_check_branch
          %512 = sbr.rel (%p510) target = $region80
        $region79: #{tpu_custom_call.1} parent=75 // pred_region
          %s513 = sand.u32 %s43, 1
          %s514 = scalar_lea.sflag [#allocation3], %s513
          %s515 = sand.u32 %s43, 1
          %s516 = smul.addr %s515, 8
          %s517 = scalar_lea.vmem [#allocation2], %s516
          %s519 = ssub.s32 128, 128
          %520 = vsyncadd %s514, %s519
          %s521 = smul.addr %s33, 128
          %s522 = scalar_lea.hbm %s0, %s521
          %s524 = sshll.u32 %s517, 4
          %s525 = int_to_ptr.vmem [resolvable:$true] %s524
          %527 = dma.hbm_to_vmem [thread:$0]  %s522, 128, %s525, %s514
        $region80: #{tpu_custom_call.1} parent=75 // pred_fallthru
          _
        // Predicated region
        $region81: #{tpu_custom_call.1} parent=75 // pred_check
          %p528 = pneg %p79
        $region82: #{tpu_custom_call.1} parent=75 // pred_check_branch
          %530 = sbr.rel (%p528) target = $region84
        $region83: #{tpu_custom_call.1} parent=75 // pred_region
          %s531 = sand.u32 %s33, 1
          %s532 = scalar_lea.sflag [#allocation6], %s531
          %s533 = sand.u32 %s69, 1
          %s534 = smul.addr %s533, 8
          %s535 = scalar_lea.vmem [#allocation5], %s534
          %s537 = ssub.s32 128, 128
          %538 = vsyncadd %s532, %s537
          %s539 = smul.addr %s33, 128
          %s540 = scalar_lea.hbm %s1, %s539
          %s542 = sshll.u32 %s535, 4
          %s543 = int_to_ptr.vmem [resolvable:$true] %s542
          %545 = dma.hbm_to_vmem [thread:$0]  %s540, 128, %s543, %s532
        $region84: #{tpu_custom_call.1} parent=75 // pred_fallthru
          _
      $region76: #{tpu_custom_call.1} parent=5 // pred_fallthru
        _
      %p546 = scmp.le.s32.totalorder 1, %s33
      %p547 = scmp.lt.s32.totalorder %s33, 3
      %p548 = pnand %p546, %p547
      %p549 = pneg %p548
      // Predicated region
      $region85: #{tpu_custom_call.1} parent=5 // pred_check
        _
      $region86: #{tpu_custom_call.1} parent=5 // pred_check_branch
        %551 = sbr.rel (%p548) target = $region88
      $region87: #{tpu_custom_call.1} parent=5 // pred_region
        %s552 = ssub.s32 %s33, 1
        %s553 = sand.u32 %s46, 1
        %s554 = scalar_lea.sflag [#allocation3], %s553
        %s555 = sand.u32 %s46, 1
        %s556 = smul.addr %s555, 8
        %s557 = scalar_lea.vmem [#allocation2], %s556
        // Predicated region
        $region89: #{tpu_custom_call.1} parent=87 // pred_check
          %p558 = pneg %p59
        $region90: #{tpu_custom_call.1} parent=87 // pred_check_branch
          %560 = sbr.rel (%p558) target = $region92
        $region91: #{tpu_custom_call.1} parent=87 // pred_region
          %561 = dma.done %s554, 128
        $region92: #{tpu_custom_call.1} parent=87 // pred_fallthru
          _
        %s562 = sand.u32 %s38, 1
        %s563 = scalar_lea.sflag [#allocation6], %s562
        %s564 = sand.u32 %s72, 1
        %s565 = smul.addr %s564, 8
        %s566 = scalar_lea.vmem [#allocation5], %s565
        // Predicated region
        $region93: #{tpu_custom_call.1} parent=87 // pred_check
          %p567 = pneg %p85
        $region94: #{tpu_custom_call.1} parent=87 // pred_check_branch
          %569 = sbr.rel (%p567) target = $region96
        $region95: #{tpu_custom_call.1} parent=87 // pred_region
          %570 = dma.done %s563, 128
        $region96: #{tpu_custom_call.1} parent=87 // pred_fallthru
          _
        // Predicated region
        $region97: #{tpu_custom_call.1} parent=87 // pred_check
          %p571 = pneg %p169
        $region98: #{tpu_custom_call.1} parent=87 // pred_check_branch
          %573 = sbr.rel (%p571) target = $region100
        $region99: #{tpu_custom_call.1} parent=87 // pred_region
          %574 = dma.done [#allocation6], 512
        $region100: #{tpu_custom_call.1} parent=87 // pred_fallthru
          _
        // Predicated region
        $region101: #{tpu_custom_call.1} parent=87 // pred_check
          %p575 = pneg %p337
        $region102: #{tpu_custom_call.1} parent=87 // pred_check_branch
          %577 = sbr.rel (%p575) target = $region104
        $region103: #{tpu_custom_call.1} parent=87 // pred_region
          %578 = dma.done [#allocation9], 512
        $region104: #{tpu_custom_call.1} parent=87 // pred_fallthru
          _
        %s579 = sand.u32 %s46, 1
        %s580 = scalar_lea.sflag [#allocation3], %s579
        %s581 = sand.u32 %s46, 1
        %s582 = smul.addr %s581, 8
        %s583 = scalar_lea.vmem [#allocation2], %s582
        %p584 = pneg %p59
        %p585 = pneg %p56
        %s586 = sand.u32 %s38, 1
        %s587 = scalar_lea.sflag [#allocation6], %s586
        %s588 = sand.u32 %s72, 1
        %s589 = smul.addr %s588, 8
        %s590 = scalar_lea.vmem [#allocation5], %s589
        %p591 = pneg %p85
        %p592 = pneg %p82
        %p593 = pneg %p106
        %p594 = pneg %p103
        %p595 = pneg %p127
        %p596 = pneg %p124
        %p597 = pneg %p148
        %p598 = pneg %p145
        %p599 = pneg %p169
        %p600 = pneg %p166
        %p601 = pneg %p190
        %p602 = pneg %p187
        %p603 = pneg %p211
        %p604 = pneg %p208
        %p605 = pneg %p232
        %p606 = pneg %p229
        %p607 = pneg %p253
        %p608 = pneg %p250
        %p609 = pneg %p274
        %p610 = pneg %p271
        %p611 = pneg %p295
        %p612 = pneg %p292
        %p613 = pneg %p316
        %p614 = pneg %p313
        %p615 = pneg %p337
        %p616 = pneg %p334
        %p617 = pneg %p358
        %p618 = pneg %p355
        %p619 = pneg %p379
        %p620 = pneg %p376
        %p621 = pneg %p400
        %p622 = pneg %p397
        %p623 = pneg %p426
        %p624 = pneg %p423
        %s625 = sand.u32 %s413, 1
        %s626 = scalar_lea.sflag [#allocation4], %s625
        %s627 = sand.u32 %s413, 1
        %s628 = smul.addr %s627, 8
        %s629 = scalar_lea.vmem [#allocation10], %s628
        %v630 = vld [vmem:[%s557] sm:$0xff]
        %v631 = vld [vmem:[%s566] sm:$0xff]
        %v632 = vld [vmem:[%s2] sm:$0xff]
        %v633 = vld [vmem:[%s2 + $0x8] sm:$0xff]
        %v634 = vld [vmem:[%s2 + $0x10] sm:$0xff]
        %v635 = vld [vmem:[%s2 + $0x18] sm:$0xff]
        %vm636 = vcmask 261120
        %v638 = vsel %vm636, %v630, 0
        %v641 = vsel %vm636, %v632, 0
        %v644 = vsel %vm636, %v633, 0
        %v647 = vsel %vm636, %v634, 0
        %v650 = vsel %vm636, %v635, 0
        %652 = vmatprep.subr.mxu0 0.0
        %653 = vmatpush1.xpose.msra.mxu0 0.0
        %654 = vmatprep.subr.mxu0 0.0
        %655 = vmatpush1.xpose.msra.mxu0 0.0
        %656 = vmatprep.subr.mxu0 0.0
        %657 = vmatpush1.xpose.msra.mxu0 0.0
        %658 = vmatprep.subr.mxu0 0.0
        %659 = vmatpush1.xpose.msra.mxu0 0.0
        %660 = vmatprep.subr.mxu0 0.0
        %661 = vmatpush1.xpose.msra.mxu0 0.0
        %662 = vmatprep.subr.mxu0 0.0
        %663 = vmatpush1.xpose.msra.mxu0 0.0
        %664 = vmatprep.subr.mxu0 0.0
        %665 = vmatpush1.xpose.msra.mxu0 0.0
        %666 = vmatprep.subr.mxu0 0.0
        %667 = vmatpush1.xpose.msra.mxu0 0.0
        %668 = vmatprep.subr.mxu0 0.0
        %669 = vmatpush1.xpose.msra.mxu0 0.0
        %670 = vmatprep.subr.mxu0 0.0
        %671 = vmatpush1.xpose.msra.mxu0 0.0
        %672 = vmatprep.subr.mxu0 0.0
        %673 = vmatpush1.xpose.msra.mxu0 0.0
        %674 = vmatprep.subr.mxu0 0.0
        %675 = vmatpush1.xpose.msra.mxu0 0.0
        %676 = vmatprep.subr.mxu0 0.0
        %677 = vmatpush1.xpose.msra.mxu0 %v650
        %678 = vmatprep.subr.mxu0 0.0
        %679 = vmatpush1.xpose.msra.mxu0 %v647
        %680 = vmatprep.subr.mxu0 0.0
        %681 = vmatpush1.xpose.msra.mxu0 %v644
        %682 = vmatprep.subr.mxu0 0.0
        %683 = vmatpush1.xpose.msra.mxu0 %v641
        %684 = vmatprep.subr.mxu0 0.0
        %685 = vmatpush2.xpose.msra.mxu0 0.0
        %686 = vmatprep.subr.mxu0 0.0
        %687 = vmatpush2.xpose.msra.mxu0 0.0
        %688 = vmatprep.subr.mxu0 0.0
        %689 = vmatpush2.xpose.msra.mxu0 0.0
        %690 = vmatprep.subr.mxu0 0.0
        %691 = vmatpush2.xpose.msra.mxu0 0.0
        %692 = vmatprep.subr.mxu0 0.0
        %693 = vmatpush2.xpose.msra.mxu0 0.0
        %694 = vmatprep.subr.mxu0 0.0
        %695 = vmatpush2.xpose.msra.mxu0 0.0
        %696 = vmatprep.subr.mxu0 0.0
        %697 = vmatpush2.xpose.msra.mxu0 0.0
        %698 = vmatprep.subr.mxu0 0.0
        %699 = vmatpush2.xpose.msra.mxu0 0.0
        %700 = vmatprep.subr.mxu0 0.0
        %701 = vmatpush2.xpose.msra.mxu0 0.0
        %702 = vmatprep.subr.mxu0 0.0
        %703 = vmatpush2.xpose.msra.mxu0 0.0
        %704 = vmatprep.subr.mxu0 0.0
        %705 = vmatpush2.xpose.msra.mxu0 0.0
        %706 = vmatprep.subr.mxu0 0.0
        %707 = vmatpush2.xpose.msra.mxu0 0.0
        %708 = vmatprep.subr.mxu0 0.0
        %709 = vmatpush2.xpose.msra.mxu0 0.0
        %710 = vmatprep.subr.mxu0 0.0
        %711 = vmatpush2.xpose.msra.mxu0 0.0
        %712 = vmatprep.subr.mxu0 0.0
        %713 = vmatpush2.xpose.msra.mxu0 0.0
        %714 = vmatprep.subr.mxu0 0.0
        %715 = vmatpush2.xpose.msra.mxu0 0.0
        %716 = vmatprep.mubr.f32.mxu0 0.0
        %717 = vmatmul.mubr.f32.gmra.mxu0 %v638
        %v718 = vpop.f32.mrf.mxu0
        %v719 = vadd.f32 0.0, %v718
        %v720 = vpop.f32.mrf.mxu0
        %721 = vdwg.mxu0
        %v722 = vld [vmem:[%s3] sm:$0xff]
        %v723 = vld [vmem:[%s3 + $0x8] sm:$0xff]
        %v724 = vld [vmem:[%s3 + $0x10] sm:$0xff]
        %v725 = vld [vmem:[%s3 + $0x18] sm:$0xff]
        %v727 = vsel %vm636, %v722, 0
        %v730 = vsel %vm636, %v723, 0
        %v733 = vsel %vm636, %v724, 0
        %v736 = vsel %vm636, %v725, 0
        %738 = vmatprep.subr.mxu0 0.0
        %739 = vmatpush1.xpose.msra.mxu0 0.0
        %740 = vmatprep.subr.mxu0 0.0
        %741 = vmatpush1.xpose.msra.mxu0 0.0
        %742 = vmatprep.subr.mxu0 0.0
        %743 = vmatpush1.xpose.msra.mxu0 0.0
        %744 = vmatprep.subr.mxu0 0.0
        %745 = vmatpush1.xpose.msra.mxu0 0.0
        %746 = vmatprep.subr.mxu0 0.0
        %747 = vmatpush1.xpose.msra.mxu0 0.0
        %748 = vmatprep.subr.mxu0 0.0
        %749 = vmatpush1.xpose.msra.mxu0 0.0
        %750 = vmatprep.subr.mxu0 0.0
        %751 = vmatpush1.xpose.msra.mxu0 0.0
        %752 = vmatprep.subr.mxu0 0.0
        %753 = vmatpush1.xpose.msra.mxu0 0.0
        %754 = vmatprep.subr.mxu0 0.0
        %755 = vmatpush1.xpose.msra.mxu0 0.0
        %756 = vmatprep.subr.mxu0 0.0
        %757 = vmatpush1.xpose.msra.mxu0 0.0
        %758 = vmatprep.subr.mxu0 0.0
        %759 = vmatpush1.xpose.msra.mxu0 0.0
        %760 = vmatprep.subr.mxu0 0.0
        %761 = vmatpush1.xpose.msra.mxu0 0.0
        %762 = vmatprep.subr.mxu0 0.0
        %763 = vmatpush1.xpose.msra.mxu0 %v736
        %764 = vmatprep.subr.mxu0 0.0
        %765 = vmatpush1.xpose.msra.mxu0 %v733
        %766 = vmatprep.subr.mxu0 0.0
        %767 = vmatpush1.xpose.msra.mxu0 %v730
        %768 = vmatprep.subr.mxu0 0.0
        %769 = vmatpush1.xpose.msra.mxu0 %v727
        %770 = vmatprep.subr.mxu0 0.0
        %771 = vmatpush2.xpose.msra.mxu0 0.0
        %772 = vmatprep.subr.mxu0 0.0
        %773 = vmatpush2.xpose.msra.mxu0 0.0
        %774 = vmatprep.subr.mxu0 0.0
        %775 = vmatpush2.xpose.msra.mxu0 0.0
        %776 = vmatprep.subr.mxu0 0.0
        %777 = vmatpush2.xpose.msra.mxu0 0.0
        %778 = vmatprep.subr.mxu0 0.0
        %779 = vmatpush2.xpose.msra.mxu0 0.0
        %780 = vmatprep.subr.mxu0 0.0
        %781 = vmatpush2.xpose.msra.mxu0 0.0
        %782 = vmatprep.subr.mxu0 0.0
        %783 = vmatpush2.xpose.msra.mxu0 0.0
        %784 = vmatprep.subr.mxu0 0.0
        %785 = vmatpush2.xpose.msra.mxu0 0.0
        %786 = vmatprep.subr.mxu0 0.0
        %787 = vmatpush2.xpose.msra.mxu0 0.0
        %788 = vmatprep.subr.mxu0 0.0
        %789 = vmatpush2.xpose.msra.mxu0 0.0
        %790 = vmatprep.subr.mxu0 0.0
        %791 = vmatpush2.xpose.msra.mxu0 0.0
        %792 = vmatprep.subr.mxu0 0.0
        %793 = vmatpush2.xpose.msra.mxu0 0.0
        %794 = vmatprep.subr.mxu0 0.0
        %795 = vmatpush2.xpose.msra.mxu0 0.0
        %796 = vmatprep.subr.mxu0 0.0
        %797 = vmatpush2.xpose.msra.mxu0 0.0
        %798 = vmatprep.subr.mxu0 0.0
        %799 = vmatpush2.xpose.msra.mxu0 0.0
        %800 = vmatprep.subr.mxu0 0.0
        %801 = vmatpush2.xpose.msra.mxu0 0.0
        %802 = vmatprep.mubr.f32.mxu0 0.0
        %803 = vmatmul.mubr.f32.gmra.mxu0 %v638
        %v804 = vpop.f32.mrf.mxu0
        %v805 = vadd.f32 0.0, %v804
        %v806 = vpop.f32.mrf.mxu0
        %807 = vdwg.mxu0
        %v808 = vld [vmem:[%s4] sm:$0xff]
        %v809 = vld [vmem:[%s4 + $0x8] sm:$0xff]
        %v810 = vld [vmem:[%s4 + $0x10] sm:$0xff]
        %v811 = vld [vmem:[%s4 + $0x18] sm:$0xff]
        %v813 = vsel %vm636, %v808, 0
        %v816 = vsel %vm636, %v809, 0
        %v819 = vsel %vm636, %v810, 0
        %v822 = vsel %vm636, %v811, 0
        %824 = vmatprep.subr.mxu0 0.0
        %825 = vmatpush1.xpose.msra.mxu0 0.0
        %826 = vmatprep.subr.mxu0 0.0
        %827 = vmatpush1.xpose.msra.mxu0 0.0
        %828 = vmatprep.subr.mxu0 0.0
        %829 = vmatpush1.xpose.msra.mxu0 0.0
        %830 = vmatprep.subr.mxu0 0.0
        %831 = vmatpush1.xpose.msra.mxu0 0.0
        %832 = vmatprep.subr.mxu0 0.0
        %833 = vmatpush1.xpose.msra.mxu0 0.0
        %834 = vmatprep.subr.mxu0 0.0
        %835 = vmatpush1.xpose.msra.mxu0 0.0
        %836 = vmatprep.subr.mxu0 0.0
        %837 = vmatpush1.xpose.msra.mxu0 0.0
        %838 = vmatprep.subr.mxu0 0.0
        %839 = vmatpush1.xpose.msra.mxu0 0.0
        %840 = vmatprep.subr.mxu0 0.0
        %841 = vmatpush1.xpose.msra.mxu0 0.0
        %842 = vmatprep.subr.mxu0 0.0
        %843 = vmatpush1.xpose.msra.mxu0 0.0
        %844 = vmatprep.subr.mxu0 0.0
        %845 = vmatpush1.xpose.msra.mxu0 0.0
        %846 = vmatprep.subr.mxu0 0.0
        %847 = vmatpush1.xpose.msra.mxu0 0.0
        %848 = vmatprep.subr.mxu0 0.0
        %849 = vmatpush1.xpose.msra.mxu0 %v822
        %850 = vmatprep.subr.mxu0 0.0
        %851 = vmatpush1.xpose.msra.mxu0 %v819
        %852 = vmatprep.subr.mxu0 0.0
        %853 = vmatpush1.xpose.msra.mxu0 %v816
        %854 = vmatprep.subr.mxu0 0.0
        %855 = vmatpush1.xpose.msra.mxu0 %v813
        %856 = vmatprep.subr.mxu0 0.0
        %857 = vmatpush2.xpose.msra.mxu0 0.0
        %858 = vmatprep.subr.mxu0 0.0
        %859 = vmatpush2.xpose.msra.mxu0 0.0
        %860 = vmatprep.subr.mxu0 0.0
        %861 = vmatpush2.xpose.msra.mxu0 0.0
        %862 = vmatprep.subr.mxu0 0.0
        %863 = vmatpush2.xpose.msra.mxu0 0.0
        %864 = vmatprep.subr.mxu0 0.0
        %865 = vmatpush2.xpose.msra.mxu0 0.0
        %866 = vmatprep.subr.mxu0 0.0
        %867 = vmatpush2.xpose.msra.mxu0 0.0
        %868 = vmatprep.subr.mxu0 0.0
        %869 = vmatpush2.xpose.msra.mxu0 0.0
        %870 = vmatprep.subr.mxu0 0.0
        %871 = vmatpush2.xpose.msra.mxu0 0.0
        %872 = vmatprep.subr.mxu0 0.0
        %873 = vmatpush2.xpose.msra.mxu0 0.0
        %874 = vmatprep.subr.mxu0 0.0
        %875 = vmatpush2.xpose.msra.mxu0 0.0
        %876 = vmatprep.subr.mxu0 0.0
        %877 = vmatpush2.xpose.msra.mxu0 0.0
        %878 = vmatprep.subr.mxu0 0.0
        %879 = vmatpush2.xpose.msra.mxu0 0.0
        %880 = vmatprep.subr.mxu0 0.0
        %881 = vmatpush2.xpose.msra.mxu0 0.0
        %882 = vmatprep.subr.mxu0 0.0
        %883 = vmatpush2.xpose.msra.mxu0 0.0
        %884 = vmatprep.subr.mxu0 0.0
        %885 = vmatpush2.xpose.msra.mxu0 0.0
        %886 = vmatprep.subr.mxu0 0.0
        %887 = vmatpush2.xpose.msra.mxu0 0.0
        %888 = vmatprep.mubr.f32.mxu0 0.0
        %889 = vmatmul.mubr.f32.gmra.mxu0 %v638
        %v890 = vpop.f32.mrf.mxu0
        %v891 = vadd.f32 0.0, %v890
        %v892 = vpop.f32.mrf.mxu0
        %893 = vdwg.mxu0
        %vm894 = vcmask 64512
        %v896 = vsel %vm894, %v719, 0
        %v899 = vsel %vm894, %v805, 0
        %901 = vmatprep.subr.mxu0 0.0
        %902 = vmatpush1.xpose.msra.mxu0 0.0
        %903 = vmatprep.subr.mxu0 0.0
        %904 = vmatpush1.xpose.msra.mxu0 0.0
        %905 = vmatprep.subr.mxu0 0.0
        %906 = vmatpush1.xpose.msra.mxu0 0.0
        %907 = vmatprep.subr.mxu0 0.0
        %908 = vmatpush1.xpose.msra.mxu0 0.0
        %909 = vmatprep.subr.mxu0 0.0
        %910 = vmatpush1.xpose.msra.mxu0 0.0
        %911 = vmatprep.subr.mxu0 0.0
        %912 = vmatpush1.xpose.msra.mxu0 0.0
        %913 = vmatprep.subr.mxu0 0.0
        %914 = vmatpush1.xpose.msra.mxu0 0.0
        %915 = vmatprep.subr.mxu0 0.0
        %916 = vmatpush1.xpose.msra.mxu0 0.0
        %917 = vmatprep.subr.mxu0 0.0
        %918 = vmatpush1.xpose.msra.mxu0 0.0
        %919 = vmatprep.subr.mxu0 0.0
        %920 = vmatpush1.xpose.msra.mxu0 0.0
        %921 = vmatprep.subr.mxu0 0.0
        %922 = vmatpush1.xpose.msra.mxu0 0.0
        %923 = vmatprep.subr.mxu0 0.0
        %924 = vmatpush1.xpose.msra.mxu0 0.0
        %925 = vmatprep.subr.mxu0 0.0
        %926 = vmatpush1.xpose.msra.mxu0 0.0
        %927 = vmatprep.subr.mxu0 0.0
        %928 = vmatpush1.xpose.msra.mxu0 0.0
        %929 = vmatprep.subr.mxu0 0.0
        %930 = vmatpush1.xpose.msra.mxu0 0.0
        %931 = vmatprep.subr.mxu0 0.0
        %932 = vmatpush1.xpose.msra.mxu0 %v899
        %933 = vmatprep.subr.mxu0 0.0
        %934 = vmatpush2.xpose.msra.mxu0 0.0
        %935 = vmatprep.subr.mxu0 0.0
        %936 = vmatpush2.xpose.msra.mxu0 0.0
        %937 = vmatprep.subr.mxu0 0.0
        %938 = vmatpush2.xpose.msra.mxu0 0.0
        %939 = vmatprep.subr.mxu0 0.0
        %940 = vmatpush2.xpose.msra.mxu0 0.0
        %941 = vmatprep.subr.mxu0 0.0
        %942 = vmatpush2.xpose.msra.mxu0 0.0
        %943 = vmatprep.subr.mxu0 0.0
        %944 = vmatpush2.xpose.msra.mxu0 0.0
        %945 = vmatprep.subr.mxu0 0.0
        %946 = vmatpush2.xpose.msra.mxu0 0.0
        %947 = vmatprep.subr.mxu0 0.0
        %948 = vmatpush2.xpose.msra.mxu0 0.0
        %949 = vmatprep.subr.mxu0 0.0
        %950 = vmatpush2.xpose.msra.mxu0 0.0
        %951 = vmatprep.subr.mxu0 0.0
        %952 = vmatpush2.xpose.msra.mxu0 0.0
        %953 = vmatprep.subr.mxu0 0.0
        %954 = vmatpush2.xpose.msra.mxu0 0.0
        %955 = vmatprep.subr.mxu0 0.0
        %956 = vmatpush2.xpose.msra.mxu0 0.0
        %957 = vmatprep.subr.mxu0 0.0
        %958 = vmatpush2.xpose.msra.mxu0 0.0
        %959 = vmatprep.subr.mxu0 0.0
        %960 = vmatpush2.xpose.msra.mxu0 0.0
        %961 = vmatprep.subr.mxu0 0.0
        %962 = vmatpush2.xpose.msra.mxu0 0.0
        %963 = vmatprep.subr.mxu0 0.0
        %964 = vmatpush2.xpose.msra.mxu0 0.0
        %965 = vmatprep.mubr.f32.mxu0 0.0
        %966 = vmatmul.mubr.f32.gmra.mxu0 %v896
        %v967 = vpop.f32.mrf.mxu0
        %v968 = vadd.f32 0.0, %v967
        %v969 = vpop.f32.mrf.mxu0
        %970 = vdwg.mxu0
        %v971 = vmul.f32 %v968, 0.35355338
        %vm972 = vcmp.eq.f32.partialorder %v631, 0.0
        %v973 = vsel %vm972, -1e+09, %v971
        %v974 = vsel %vm894, %v973, -inf
        %975 = vmax.xlane.f32.xlu0 %v974
        %v976 = vpop.xlane.xlu0 %975
        %v977 = vsub.f32 %v973, %v976
        %v978 = vmul.f32 %v977, 1.442695
        %v979 = vpow.pop %v978
        %v980 = vsel %vm894, %v979, 0.0
        %981 = vadd.xlane.f32.xlu0 %v980
        %v982 = vpop.xlane.xlu0 %981
        %v983 = vrcp.pop %v982
        %v984 = vmul.f32 %v979, %v983
        %v986 = vsel %vm894, %v984, 0
        %988 = vmatprep.subr.mxu0 0.0
        %989 = vmatpush1.msra.mxu0 0.0
        %990 = vmatprep.subr.mxu0 0.0
        %991 = vmatpush1.msra.mxu0 0.0
        %992 = vmatprep.subr.mxu0 0.0
        %993 = vmatpush1.msra.mxu0 0.0
        %994 = vmatprep.subr.mxu0 0.0
        %995 = vmatpush1.msra.mxu0 0.0
        %996 = vmatprep.subr.mxu0 0.0
        %997 = vmatpush1.msra.mxu0 0.0
        %998 = vmatprep.subr.mxu0 0.0
        %999 = vmatpush1.msra.mxu0 0.0
        %1000 = vmatprep.subr.mxu0 0.0
        %1001 = vmatpush1.msra.mxu0 0.0
        %1002 = vmatprep.subr.mxu0 0.0
        %1003 = vmatpush1.msra.mxu0 0.0
        %1004 = vmatprep.subr.mxu0 0.0
        %1005 = vmatpush1.msra.mxu0 0.0
        %1006 = vmatprep.subr.mxu0 0.0
        %1007 = vmatpush1.msra.mxu0 0.0
        %1008 = vmatprep.subr.mxu0 0.0
        %1009 = vmatpush1.msra.mxu0 0.0
        %1010 = vmatprep.subr.mxu0 0.0
        %1011 = vmatpush1.msra.mxu0 0.0
        %1012 = vmatprep.subr.mxu0 0.0
        %1013 = vmatpush1.msra.mxu0 0.0
        %1014 = vmatprep.subr.mxu0 0.0
        %1015 = vmatpush1.msra.mxu0 0.0
        %1016 = vmatprep.subr.mxu0 0.0
        %1017 = vmatpush1.msra.mxu0 0.0
        %1018 = vmatprep.subr.mxu0 0.0
        %1019 = vmatpush1.msra.mxu0 %v891
        %1020 = vmatprep.subr.mxu0 0.0
        %1021 = vmatpush2.msra.mxu0 0.0
        %1022 = vmatprep.subr.mxu0 0.0
        %1023 = vmatpush2.msra.mxu0 0.0
        %1024 = vmatprep.subr.mxu0 0.0
        %1025 = vmatpush2.msra.mxu0 0.0
        %1026 = vmatprep.subr.mxu0 0.0
        %1027 = vmatpush2.msra.mxu0 0.0
        %1028 = vmatprep.subr.mxu0 0.0
        %1029 = vmatpush2.msra.mxu0 0.0
        %1030 = vmatprep.subr.mxu0 0.0
        %1031 = vmatpush2.msra.mxu0 0.0
        %1032 = vmatprep.subr.mxu0 0.0
        %1033 = vmatpush2.msra.mxu0 0.0
        %1034 = vmatprep.subr.mxu0 0.0
        %1035 = vmatpush2.msra.mxu0 0.0
        %1036 = vmatprep.subr.mxu0 0.0
        %1037 = vmatpush2.msra.mxu0 0.0
        %1038 = vmatprep.subr.mxu0 0.0
        %1039 = vmatpush2.msra.mxu0 0.0
        %1040 = vmatprep.subr.mxu0 0.0
        %1041 = vmatpush2.msra.mxu0 0.0
        %1042 = vmatprep.subr.mxu0 0.0
        %1043 = vmatpush2.msra.mxu0 0.0
        %1044 = vmatprep.subr.mxu0 0.0
        %1045 = vmatpush2.msra.mxu0 0.0
        %1046 = vmatprep.subr.mxu0 0.0
        %1047 = vmatpush2.msra.mxu0 0.0
        %1048 = vmatprep.subr.mxu0 0.0
        %1049 = vmatpush2.msra.mxu0 0.0
        %1050 = vmatprep.subr.mxu0 0.0
        %1051 = vmatpush2.msra.mxu0 0.0
        %1052 = vmatprep.mubr.f32.mxu0 0.0
        %1053 = vmatmul.mubr.f32.gmra.mxu0 %v986
        %v1054 = vpop.f32.mrf.mxu0
        %v1055 = vadd.f32 0.0, %v1054
        %v1056 = vpop.f32.mrf.mxu0
        %1057 = vdwg.mxu0
        %v1058 = vld [vmem:[#allocation7] sm:$0xff]
        %v1059 = vld [vmem:[#allocation7 + $0x8] sm:$0xff]
        %v1060 = vld [vmem:[#allocation7 + $0x10] sm:$0xff]
        %v1061 = vld [vmem:[#allocation7 + $0x18] sm:$0xff]
        %1062 = vrot.lane.b32.xlu0 %v719, 120
        %v1063 = vpop.permute.xlu0 %1062
        %1064 = vrot.lane.b32.xlu0 %v805, 120
        %v1065 = vpop.permute.xlu0 %1064
        %v1066 = vsel %vm894, %v1063, 0
        %v1068 = vsel %vm894, %v1065, 0
        %1070 = vmatprep.subr.mxu0 0.0
        %1071 = vmatpush1.xpose.msra.mxu0 0.0
        %1072 = vmatprep.subr.mxu0 0.0
        %1073 = vmatpush1.xpose.msra.mxu0 0.0
        %1074 = vmatprep.subr.mxu0 0.0
        %1075 = vmatpush1.xpose.msra.mxu0 0.0
        %1076 = vmatprep.subr.mxu0 0.0
        %1077 = vmatpush1.xpose.msra.mxu0 0.0
        %1078 = vmatprep.subr.mxu0 0.0
        %1079 = vmatpush1.xpose.msra.mxu0 0.0
        %1080 = vmatprep.subr.mxu0 0.0
        %1081 = vmatpush1.xpose.msra.mxu0 0.0
        %1082 = vmatprep.subr.mxu0 0.0
        %1083 = vmatpush1.xpose.msra.mxu0 0.0
        %1084 = vmatprep.subr.mxu0 0.0
        %1085 = vmatpush1.xpose.msra.mxu0 0.0
        %1086 = vmatprep.subr.mxu0 0.0
        %1087 = vmatpush1.xpose.msra.mxu0 0.0
        %1088 = vmatprep.subr.mxu0 0.0
        %1089 = vmatpush1.xpose.msra.mxu0 0.0
        %1090 = vmatprep.subr.mxu0 0.0
        %1091 = vmatpush1.xpose.msra.mxu0 0.0
        %1092 = vmatprep.subr.mxu0 0.0
        %1093 = vmatpush1.xpose.msra.mxu0 0.0
        %1094 = vmatprep.subr.mxu0 0.0
        %1095 = vmatpush1.xpose.msra.mxu0 0.0
        %1096 = vmatprep.subr.mxu0 0.0
        %1097 = vmatpush1.xpose.msra.mxu0 0.0
        %1098 = vmatprep.subr.mxu0 0.0
        %1099 = vmatpush1.xpose.msra.mxu0 0.0
        %1100 = vmatprep.subr.mxu0 0.0
        %1101 = vmatpush1.xpose.msra.mxu0 %v1068
        %1102 = vmatprep.subr.mxu0 0.0
        %1103 = vmatpush2.xpose.msra.mxu0 0.0
        %1104 = vmatprep.subr.mxu0 0.0
        %1105 = vmatpush2.xpose.msra.mxu0 0.0
        %1106 = vmatprep.subr.mxu0 0.0
        %1107 = vmatpush2.xpose.msra.mxu0 0.0
        %1108 = vmatprep.subr.mxu0 0.0
        %1109 = vmatpush2.xpose.msra.mxu0 0.0
        %1110 = vmatprep.subr.mxu0 0.0
        %1111 = vmatpush2.xpose.msra.mxu0 0.0
        %1112 = vmatprep.subr.mxu0 0.0
        %1113 = vmatpush2.xpose.msra.mxu0 0.0
        %1114 = vmatprep.subr.mxu0 0.0
        %1115 = vmatpush2.xpose.msra.mxu0 0.0
        %1116 = vmatprep.subr.mxu0 0.0
        %1117 = vmatpush2.xpose.msra.mxu0 0.0
        %1118 = vmatprep.subr.mxu0 0.0
        %1119 = vmatpush2.xpose.msra.mxu0 0.0
        %1120 = vmatprep.subr.mxu0 0.0
        %1121 = vmatpush2.xpose.msra.mxu0 0.0
        %1122 = vmatprep.subr.mxu0 0.0
        %1123 = vmatpush2.xpose.msra.mxu0 0.0
        %1124 = vmatprep.subr.mxu0 0.0
        %1125 = vmatpush2.xpose.msra.mxu0 0.0
        %1126 = vmatprep.subr.mxu0 0.0
        %1127 = vmatpush2.xpose.msra.mxu0 0.0
        %1128 = vmatprep.subr.mxu0 0.0
        %1129 = vmatpush2.xpose.msra.mxu0 0.0
        %1130 = vmatprep.subr.mxu0 0.0
        %1131 = vmatpush2.xpose.msra.mxu0 0.0
        %1132 = vmatprep.subr.mxu0 0.0
        %1133 = vmatpush2.xpose.msra.mxu0 0.0
        %1134 = vmatprep.mubr.f32.mxu0 0.0
        %1135 = vmatmul.mubr.f32.gmra.mxu0 %v1066
        %v1136 = vpop.f32.mrf.mxu0
        %v1137 = vadd.f32 0.0, %v1136
        %v1138 = vpop.f32.mrf.mxu0
        %1139 = vdwg.mxu0
        %v1140 = vmul.f32 %v1137, 0.35355338
        %v1141 = vsel %vm972, -1e+09, %v1140
        %v1142 = vsel %vm894, %v1141, -inf
        %1143 = vmax.xlane.f32.xlu0 %v1142
        %v1144 = vpop.xlane.xlu0 %1143
        %v1145 = vsub.f32 %v1141, %v1144
        %v1146 = vmul.f32 %v1145, 1.442695
        %v1147 = vpow.pop %v1146
        %v1148 = vsel %vm894, %v1147, 0.0
        %1149 = vadd.xlane.f32.xlu0 %v1148
        %v1150 = vpop.xlane.xlu0 %1149
        %v1151 = vrcp.pop %v1150
        %v1152 = vmul.f32 %v1147, %v1151
        %1154 = vrot.lane.b32.xlu0 %v891, 120
        %v1155 = vpop.permute.xlu0 %1154
        %v1158 = vsel %vm894, %v1152, 0
        %1160 = vmatprep.subr.mxu0 0.0
        %1161 = vmatpush1.msra.mxu0 0.0
        %1162 = vmatprep.subr.mxu0 0.0
        %1163 = vmatpush1.msra.mxu0 0.0
        %1164 = vmatprep.subr.mxu0 0.0
        %1165 = vmatpush1.msra.mxu0 0.0
        %1166 = vmatprep.subr.mxu0 0.0
        %1167 = vmatpush1.msra.mxu0 0.0
        %1168 = vmatprep.subr.mxu0 0.0
        %1169 = vmatpush1.msra.mxu0 0.0
        %1170 = vmatprep.subr.mxu0 0.0
        %1171 = vmatpush1.msra.mxu0 0.0
        %1172 = vmatprep.subr.mxu0 0.0
        %1173 = vmatpush1.msra.mxu0 0.0
        %1174 = vmatprep.subr.mxu0 0.0
        %1175 = vmatpush1.msra.mxu0 0.0
        %1176 = vmatprep.subr.mxu0 0.0
        %1177 = vmatpush1.msra.mxu0 0.0
        %1178 = vmatprep.subr.mxu0 0.0
        %1179 = vmatpush1.msra.mxu0 0.0
        %1180 = vmatprep.subr.mxu0 0.0
        %1181 = vmatpush1.msra.mxu0 0.0
        %1182 = vmatprep.subr.mxu0 0.0
        %1183 = vmatpush1.msra.mxu0 0.0
        %1184 = vmatprep.subr.mxu0 0.0
        %1185 = vmatpush1.msra.mxu0 0.0
        %1186 = vmatprep.subr.mxu0 0.0
        %1187 = vmatpush1.msra.mxu0 0.0
        %1188 = vmatprep.subr.mxu0 0.0
        %1189 = vmatpush1.msra.mxu0 0.0
        %1190 = vmatprep.subr.mxu0 0.0
        %1191 = vmatpush1.msra.mxu0 %v1155
        %1192 = vmatprep.subr.mxu0 0.0
        %1193 = vmatpush2.msra.mxu0 0.0
        %1194 = vmatprep.subr.mxu0 0.0
        %1195 = vmatpush2.msra.mxu0 0.0
        %1196 = vmatprep.subr.mxu0 0.0
        %1197 = vmatpush2.msra.mxu0 0.0
        %1198 = vmatprep.subr.mxu0 0.0
        %1199 = vmatpush2.msra.mxu0 0.0
        %1200 = vmatprep.subr.mxu0 0.0
        %1201 = vmatpush2.msra.mxu0 0.0
        %1202 = vmatprep.subr.mxu0 0.0
        %1203 = vmatpush2.msra.mxu0 0.0
        %1204 = vmatprep.subr.mxu0 0.0
        %1205 = vmatpush2.msra.mxu0 0.0
        %1206 = vmatprep.subr.mxu0 0.0
        %1207 = vmatpush2.msra.mxu0 0.0
        %1208 = vmatprep.subr.mxu0 0.0
        %1209 = vmatpush2.msra.mxu0 0.0
        %1210 = vmatprep.subr.mxu0 0.0
        %1211 = vmatpush2.msra.mxu0 0.0
        %1212 = vmatprep.subr.mxu0 0.0
        %1213 = vmatpush2.msra.mxu0 0.0
        %1214 = vmatprep.subr.mxu0 0.0
        %1215 = vmatpush2.msra.mxu0 0.0
        %1216 = vmatprep.subr.mxu0 0.0
        %1217 = vmatpush2.msra.mxu0 0.0
        %1218 = vmatprep.subr.mxu0 0.0
        %1219 = vmatpush2.msra.mxu0 0.0
        %1220 = vmatprep.subr.mxu0 0.0
        %1221 = vmatpush2.msra.mxu0 0.0
        %1222 = vmatprep.subr.mxu0 0.0
        %1223 = vmatpush2.msra.mxu0 0.0
        %1224 = vmatprep.mubr.f32.mxu0 0.0
        %1225 = vmatmul.mubr.f32.gmra.mxu0 %v1158
        %v1226 = vpop.f32.mrf.mxu0
        %v1227 = vadd.f32 0.0, %v1226
        %v1228 = vpop.f32.mrf.mxu0
        %1229 = vdwg.mxu0
        %1234 = vrot.lane.b32.xlu0 %v1058, 120
        %v1235 = vpop.permute.xlu0 %1234
        %1236 = vrot.lane.b32.xlu0 %v1059, 120
        %v1237 = vpop.permute.xlu0 %1236
        %1238 = vrot.lane.b32.xlu0 %v1060, 120
        %v1239 = vpop.permute.xlu0 %1238
        %1240 = vrot.lane.b32.xlu0 %v1061, 120
        %v1241 = vpop.permute.xlu0 %1240
        %v1243 = vsel %vm894, %v1227, 0
        %v1245 = vsel %vm894, %v1235, 0
        %v1247 = vsel %vm894, %v1237, 0
        %v1249 = vsel %vm894, %v1239, 0
        %v1251 = vsel %vm894, %v1241, 0
        %1253 = vmatprep.subr.mxu0 0.0
        %1254 = vmatpush1.xpose.msra.mxu0 0.0
        %1255 = vmatprep.subr.mxu0 0.0
        %1256 = vmatpush1.xpose.msra.mxu0 0.0
        %1257 = vmatprep.subr.mxu0 0.0
        %1258 = vmatpush1.xpose.msra.mxu0 0.0
        %1259 = vmatprep.subr.mxu0 0.0
        %1260 = vmatpush1.xpose.msra.mxu0 0.0
        %1261 = vmatprep.subr.mxu0 0.0
        %1262 = vmatpush1.xpose.msra.mxu0 0.0
        %1263 = vmatprep.subr.mxu0 0.0
        %1264 = vmatpush1.xpose.msra.mxu0 0.0
        %1265 = vmatprep.subr.mxu0 0.0
        %1266 = vmatpush1.xpose.msra.mxu0 0.0
        %1267 = vmatprep.subr.mxu0 0.0
        %1268 = vmatpush1.xpose.msra.mxu0 0.0
        %1269 = vmatprep.subr.mxu0 0.0
        %1270 = vmatpush1.xpose.msra.mxu0 0.0
        %1271 = vmatprep.subr.mxu0 0.0
        %1272 = vmatpush1.xpose.msra.mxu0 0.0
        %1273 = vmatprep.subr.mxu0 0.0
        %1274 = vmatpush1.xpose.msra.mxu0 0.0
        %1275 = vmatprep.subr.mxu0 0.0
        %1276 = vmatpush1.xpose.msra.mxu0 0.0
        %1277 = vmatprep.subr.mxu0 0.0
        %1278 = vmatpush1.xpose.msra.mxu0 %v1251
        %1279 = vmatprep.subr.mxu0 0.0
        %1280 = vmatpush1.xpose.msra.mxu0 %v1249
        %1281 = vmatprep.subr.mxu0 0.0
        %1282 = vmatpush1.xpose.msra.mxu0 %v1247
        %1283 = vmatprep.subr.mxu0 0.0
        %1284 = vmatpush1.xpose.msra.mxu0 %v1245
        %1285 = vmatprep.subr.mxu0 0.0
        %1286 = vmatpush2.xpose.msra.mxu0 0.0
        %1287 = vmatprep.subr.mxu0 0.0
        %1288 = vmatpush2.xpose.msra.mxu0 0.0
        %1289 = vmatprep.subr.mxu0 0.0
        %1290 = vmatpush2.xpose.msra.mxu0 0.0
        %1291 = vmatprep.subr.mxu0 0.0
        %1292 = vmatpush2.xpose.msra.mxu0 0.0
        %1293 = vmatprep.subr.mxu0 0.0
        %1294 = vmatpush2.xpose.msra.mxu0 0.0
        %1295 = vmatprep.subr.mxu0 0.0
        %1296 = vmatpush2.xpose.msra.mxu0 0.0
        %1297 = vmatprep.subr.mxu0 0.0
        %1298 = vmatpush2.xpose.msra.mxu0 0.0
        %1299 = vmatprep.subr.mxu0 0.0
        %1300 = vmatpush2.xpose.msra.mxu0 0.0
        %1301 = vmatprep.subr.mxu0 0.0
        %1302 = vmatpush2.xpose.msra.mxu0 0.0
        %1303 = vmatprep.subr.mxu0 0.0
        %1304 = vmatpush2.xpose.msra.mxu0 0.0
        %1305 = vmatprep.subr.mxu0 0.0
        %1306 = vmatpush2.xpose.msra.mxu0 0.0
        %1307 = vmatprep.subr.mxu0 0.0
        %1308 = vmatpush2.xpose.msra.mxu0 0.0
        %1309 = vmatprep.subr.mxu0 0.0
        %1310 = vmatpush2.xpose.msra.mxu0 0.0
        %1311 = vmatprep.subr.mxu0 0.0
        %1312 = vmatpush2.xpose.msra.mxu0 0.0
        %1313 = vmatprep.subr.mxu0 0.0
        %1314 = vmatpush2.xpose.msra.mxu0 0.0
        %1315 = vmatprep.subr.mxu0 0.0
        %1316 = vmatpush2.xpose.msra.mxu0 0.0
        %1317 = vmatprep.mubr.f32.mxu0 0.0
        %1318 = vmatmul.mubr.f32.gmra.mxu0 %v1243
        %v1319 = vpop.f32.mrf.mxu0
        %v1320 = vadd.f32 0.0, %v1319
        %v1321 = vpop.f32.mrf.mxu0
        %1322 = vdwg.mxu0
        %v1324 = vsel %vm894, %v1055, 0
        %v1326 = vsel %vm894, %v1058, 0
        %v1328 = vsel %vm894, %v1059, 0
        %v1330 = vsel %vm894, %v1060, 0
        %v1332 = vsel %vm894, %v1061, 0
        %1334 = vmatprep.subr.mxu0 0.0
        %1335 = vmatpush1.xpose.msra.mxu0 0.0
        %1336 = vmatprep.subr.mxu0 0.0
        %1337 = vmatpush1.xpose.msra.mxu0 0.0
        %1338 = vmatprep.subr.mxu0 0.0
        %1339 = vmatpush1.xpose.msra.mxu0 0.0
        %1340 = vmatprep.subr.mxu0 0.0
        %1341 = vmatpush1.xpose.msra.mxu0 0.0
        %1342 = vmatprep.subr.mxu0 0.0
        %1343 = vmatpush1.xpose.msra.mxu0 0.0
        %1344 = vmatprep.subr.mxu0 0.0
        %1345 = vmatpush1.xpose.msra.mxu0 0.0
        %1346 = vmatprep.subr.mxu0 0.0
        %1347 = vmatpush1.xpose.msra.mxu0 0.0
        %1348 = vmatprep.subr.mxu0 0.0
        %1349 = vmatpush1.xpose.msra.mxu0 0.0
        %1350 = vmatprep.subr.mxu0 0.0
        %1351 = vmatpush1.xpose.msra.mxu0 0.0
        %1352 = vmatprep.subr.mxu0 0.0
        %1353 = vmatpush1.xpose.msra.mxu0 0.0
        %1354 = vmatprep.subr.mxu0 0.0
        %1355 = vmatpush1.xpose.msra.mxu0 0.0
        %1356 = vmatprep.subr.mxu0 0.0
        %1357 = vmatpush1.xpose.msra.mxu0 0.0
        %1358 = vmatprep.subr.mxu0 0.0
        %1359 = vmatpush1.xpose.msra.mxu0 %v1332
        %1360 = vmatprep.subr.mxu0 0.0
        %1361 = vmatpush1.xpose.msra.mxu0 %v1330
        %1362 = vmatprep.subr.mxu0 0.0
        %1363 = vmatpush1.xpose.msra.mxu0 %v1328
        %1364 = vmatprep.subr.mxu0 0.0
        %1365 = vmatpush1.xpose.msra.mxu0 %v1326
        %1366 = vmatprep.subr.mxu0 0.0
        %1367 = vmatpush2.xpose.msra.mxu0 0.0
        %1368 = vmatprep.subr.mxu0 0.0
        %1369 = vmatpush2.xpose.msra.mxu0 0.0
        %1370 = vmatprep.subr.mxu0 0.0
        %1371 = vmatpush2.xpose.msra.mxu0 0.0
        %1372 = vmatprep.subr.mxu0 0.0
        %1373 = vmatpush2.xpose.msra.mxu0 0.0
        %1374 = vmatprep.subr.mxu0 0.0
        %1375 = vmatpush2.xpose.msra.mxu0 0.0
        %1376 = vmatprep.subr.mxu0 0.0
        %1377 = vmatpush2.xpose.msra.mxu0 0.0
        %1378 = vmatprep.subr.mxu0 0.0
        %1379 = vmatpush2.xpose.msra.mxu0 0.0
        %1380 = vmatprep.subr.mxu0 0.0
        %1381 = vmatpush2.xpose.msra.mxu0 0.0
        %1382 = vmatprep.subr.mxu0 0.0
        %1383 = vmatpush2.xpose.msra.mxu0 0.0
        %1384 = vmatprep.subr.mxu0 0.0
        %1385 = vmatpush2.xpose.msra.mxu0 0.0
        %1386 = vmatprep.subr.mxu0 0.0
        %1387 = vmatpush2.xpose.msra.mxu0 0.0
        %1388 = vmatprep.subr.mxu0 0.0
        %1389 = vmatpush2.xpose.msra.mxu0 0.0
        %1390 = vmatprep.subr.mxu0 0.0
        %1391 = vmatpush2.xpose.msra.mxu0 0.0
        %1392 = vmatprep.subr.mxu0 0.0
        %1393 = vmatpush2.xpose.msra.mxu0 0.0
        %1394 = vmatprep.subr.mxu0 0.0
        %1395 = vmatpush2.xpose.msra.mxu0 0.0
        %1396 = vmatprep.subr.mxu0 0.0
        %1397 = vmatpush2.xpose.msra.mxu0 0.0
        %1398 = vmatprep.mubr.f32.mxu0 0.0
        %1399 = vmatmul.mubr.f32.gmra.mxu0 %v1324
        %v1400 = vpop.f32.mrf.mxu0
        %v1401 = vadd.f32 %v1320, %v1400
        %v1402 = vpop.f32.mrf.mxu0
        %1403 = vdwg.mxu0
        %1404 = vrot.lane.b32.xlu0 %v719, 112
        %v1405 = vpop.permute.xlu0 %1404
        %1406 = vrot.lane.b32.xlu0 %v805, 112
        %v1407 = vpop.permute.xlu0 %1406
        %v1408 = vsel %vm894, %v1405, 0
        %v1410 = vsel %vm894, %v1407, 0
        %1412 = vmatprep.subr.mxu0 0.0
        %1413 = vmatpush1.xpose.msra.mxu0 0.0
        %1414 = vmatprep.subr.mxu0 0.0
        %1415 = vmatpush1.xpose.msra.mxu0 0.0
        %1416 = vmatprep.subr.mxu0 0.0
        %1417 = vmatpush1.xpose.msra.mxu0 0.0
        %1418 = vmatprep.subr.mxu0 0.0
        %1419 = vmatpush1.xpose.msra.mxu0 0.0
        %1420 = vmatprep.subr.mxu0 0.0
        %1421 = vmatpush1.xpose.msra.mxu0 0.0
        %1422 = vmatprep.subr.mxu0 0.0
        %1423 = vmatpush1.xpose.msra.mxu0 0.0
        %1424 = vmatprep.subr.mxu0 0.0
        %1425 = vmatpush1.xpose.msra.mxu0 0.0
        %1426 = vmatprep.subr.mxu0 0.0
        %1427 = vmatpush1.xpose.msra.mxu0 0.0
        %1428 = vmatprep.subr.mxu0 0.0
        %1429 = vmatpush1.xpose.msra.mxu0 0.0
        %1430 = vmatprep.subr.mxu0 0.0
        %1431 = vmatpush1.xpose.msra.mxu0 0.0
        %1432 = vmatprep.subr.mxu0 0.0
        %1433 = vmatpush1.xpose.msra.mxu0 0.0
        %1434 = vmatprep.subr.mxu0 0.0
        %1435 = vmatpush1.xpose.msra.mxu0 0.0
        %1436 = vmatprep.subr.mxu0 0.0
        %1437 = vmatpush1.xpose.msra.mxu0 0.0
        %1438 = vmatprep.subr.mxu0 0.0
        %1439 = vmatpush1.xpose.msra.mxu0 0.0
        %1440 = vmatprep.subr.mxu0 0.0
        %1441 = vmatpush1.xpose.msra.mxu0 0.0
        %1442 = vmatprep.subr.mxu0 0.0
        %1443 = vmatpush1.xpose.msra.mxu0 %v1410
        %1444 = vmatprep.subr.mxu0 0.0
        %1445 = vmatpush2.xpose.msra.mxu0 0.0
        %1446 = vmatprep.subr.mxu0 0.0
        %1447 = vmatpush2.xpose.msra.mxu0 0.0
        %1448 = vmatprep.subr.mxu0 0.0
        %1449 = vmatpush2.xpose.msra.mxu0 0.0
        %1450 = vmatprep.subr.mxu0 0.0
        %1451 = vmatpush2.xpose.msra.mxu0 0.0
        %1452 = vmatprep.subr.mxu0 0.0
        %1453 = vmatpush2.xpose.msra.mxu0 0.0
        %1454 = vmatprep.subr.mxu0 0.0
        %1455 = vmatpush2.xpose.msra.mxu0 0.0
        %1456 = vmatprep.subr.mxu0 0.0
        %1457 = vmatpush2.xpose.msra.mxu0 0.0
        %1458 = vmatprep.subr.mxu0 0.0
        %1459 = vmatpush2.xpose.msra.mxu0 0.0
        %1460 = vmatprep.subr.mxu0 0.0
        %1461 = vmatpush2.xpose.msra.mxu0 0.0
        %1462 = vmatprep.subr.mxu0 0.0
        %1463 = vmatpush2.xpose.msra.mxu0 0.0
        %1464 = vmatprep.subr.mxu0 0.0
        %1465 = vmatpush2.xpose.msra.mxu0 0.0
        %1466 = vmatprep.subr.mxu0 0.0
        %1467 = vmatpush2.xpose.msra.mxu0 0.0
        %1468 = vmatprep.subr.mxu0 0.0
        %1469 = vmatpush2.xpose.msra.mxu0 0.0
        %1470 = vmatprep.subr.mxu0 0.0
        %1471 = vmatpush2.xpose.msra.mxu0 0.0
        %1472 = vmatprep.subr.mxu0 0.0
        %1473 = vmatpush2.xpose.msra.mxu0 0.0
        %1474 = vmatprep.subr.mxu0 0.0
        %1475 = vmatpush2.xpose.msra.mxu0 0.0
        %1476 = vmatprep.mubr.f32.mxu0 0.0
        %1477 = vmatmul.mubr.f32.gmra.mxu0 %v1408
        %v1478 = vpop.f32.mrf.mxu0
        %v1479 = vadd.f32 0.0, %v1478
        %v1480 = vpop.f32.mrf.mxu0
        %1481 = vdwg.mxu0
        %v1482 = vmul.f32 %v1479, 0.35355338
        %v1483 = vsel %vm972, -1e+09, %v1482
        %v1484 = vsel %vm894, %v1483, -inf
        %1485 = vmax.xlane.f32.xlu0 %v1484
        %v1486 = vpop.xlane.xlu0 %1485
        %v1487 = vsub.f32 %v1483, %v1486
        %v1488 = vmul.f32 %v1487, 1.442695
        %v1489 = vpow.pop %v1488
        %v1490 = vsel %vm894, %v1489, 0.0
        %1491 = vadd.xlane.f32.xlu0 %v1490
        %v1492 = vpop.xlane.xlu0 %1491
        %v1493 = vrcp.pop %v1492
        %v1494 = vmul.f32 %v1489, %v1493
        %1495 = vrot.lane.b32.xlu0 %v891, 112
        %v1496 = vpop.permute.xlu0 %1495
        %v1499 = vsel %vm894, %v1494, 0
        %1501 = vmatprep.subr.mxu0 0.0
        %1502 = vmatpush1.msra.mxu0 0.0
        %1503 = vmatprep.subr.mxu0 0.0
        %1504 = vmatpush1.msra.mxu0 0.0
        %1505 = vmatprep.subr.mxu0 0.0
        %1506 = vmatpush1.msra.mxu0 0.0
        %1507 = vmatprep.subr.mxu0 0.0
        %1508 = vmatpush1.msra.mxu0 0.0
        %1509 = vmatprep.subr.mxu0 0.0
        %1510 = vmatpush1.msra.mxu0 0.0
        %1511 = vmatprep.subr.mxu0 0.0
        %1512 = vmatpush1.msra.mxu0 0.0
        %1513 = vmatprep.subr.mxu0 0.0
        %1514 = vmatpush1.msra.mxu0 0.0
        %1515 = vmatprep.subr.mxu0 0.0
        %1516 = vmatpush1.msra.mxu0 0.0
        %1517 = vmatprep.subr.mxu0 0.0
        %1518 = vmatpush1.msra.mxu0 0.0
        %1519 = vmatprep.subr.mxu0 0.0
        %1520 = vmatpush1.msra.mxu0 0.0
        %1521 = vmatprep.subr.mxu0 0.0
        %1522 = vmatpush1.msra.mxu0 0.0
        %1523 = vmatprep.subr.mxu0 0.0
        %1524 = vmatpush1.msra.mxu0 0.0
        %1525 = vmatprep.subr.mxu0 0.0
        %1526 = vmatpush1.msra.mxu0 0.0
        %1527 = vmatprep.subr.mxu0 0.0
        %1528 = vmatpush1.msra.mxu0 0.0
        %1529 = vmatprep.subr.mxu0 0.0
        %1530 = vmatpush1.msra.mxu0 0.0
        %1531 = vmatprep.subr.mxu0 0.0
        %1532 = vmatpush1.msra.mxu0 %v1496
        %1533 = vmatprep.subr.mxu0 0.0
        %1534 = vmatpush2.msra.mxu0 0.0
        %1535 = vmatprep.subr.mxu0 0.0
        %1536 = vmatpush2.msra.mxu0 0.0
        %1537 = vmatprep.subr.mxu0 0.0
        %1538 = vmatpush2.msra.mxu0 0.0
        %1539 = vmatprep.subr.mxu0 0.0
        %1540 = vmatpush2.msra.mxu0 0.0
        %1541 = vmatprep.subr.mxu0 0.0
        %1542 = vmatpush2.msra.mxu0 0.0
        %1543 = vmatprep.subr.mxu0 0.0
        %1544 = vmatpush2.msra.mxu0 0.0
        %1545 = vmatprep.subr.mxu0 0.0
        %1546 = vmatpush2.msra.mxu0 0.0
        %1547 = vmatprep.subr.mxu0 0.0
        %1548 = vmatpush2.msra.mxu0 0.0
        %1549 = vmatprep.subr.mxu0 0.0
        %1550 = vmatpush2.msra.mxu0 0.0
        %1551 = vmatprep.subr.mxu0 0.0
        %1552 = vmatpush2.msra.mxu0 0.0
        %1553 = vmatprep.subr.mxu0 0.0
        %1554 = vmatpush2.msra.mxu0 0.0
        %1555 = vmatprep.subr.mxu0 0.0
        %1556 = vmatpush2.msra.mxu0 0.0
        %1557 = vmatprep.subr.mxu0 0.0
        %1558 = vmatpush2.msra.mxu0 0.0
        %1559 = vmatprep.subr.mxu0 0.0
        %1560 = vmatpush2.msra.mxu0 0.0
        %1561 = vmatprep.subr.mxu0 0.0
        %1562 = vmatpush2.msra.mxu0 0.0
        %1563 = vmatprep.subr.mxu0 0.0
        %1564 = vmatpush2.msra.mxu0 0.0
        %1565 = vmatprep.mubr.f32.mxu0 0.0
        %1566 = vmatmul.mubr.f32.gmra.mxu0 %v1499
        %v1567 = vpop.f32.mrf.mxu0
        %v1568 = vadd.f32 0.0, %v1567
        %v1569 = vpop.f32.mrf.mxu0
        %1570 = vdwg.mxu0
        %1571 = vrot.lane.b32.xlu0 %v1058, 112
        %v1572 = vpop.permute.xlu0 %1571
        %1573 = vrot.lane.b32.xlu0 %v1059, 112
        %v1574 = vpop.permute.xlu0 %1573
        %1575 = vrot.lane.b32.xlu0 %v1060, 112
        %v1576 = vpop.permute.xlu0 %1575
        %1577 = vrot.lane.b32.xlu0 %v1061, 112
        %v1578 = vpop.permute.xlu0 %1577
        %v1580 = vsel %vm894, %v1568, 0
        %v1582 = vsel %vm894, %v1572, 0
        %v1584 = vsel %vm894, %v1574, 0
        %v1586 = vsel %vm894, %v1576, 0
        %v1588 = vsel %vm894, %v1578, 0
        %1590 = vmatprep.subr.mxu0 0.0
        %1591 = vmatpush1.xpose.msra.mxu0 0.0
        %1592 = vmatprep.subr.mxu0 0.0
        %1593 = vmatpush1.xpose.msra.mxu0 0.0
        %1594 = vmatprep.subr.mxu0 0.0
        %1595 = vmatpush1.xpose.msra.mxu0 0.0
        %1596 = vmatprep.subr.mxu0 0.0
        %1597 = vmatpush1.xpose.msra.mxu0 0.0
        %1598 = vmatprep.subr.mxu0 0.0
        %1599 = vmatpush1.xpose.msra.mxu0 0.0
        %1600 = vmatprep.subr.mxu0 0.0
        %1601 = vmatpush1.xpose.msra.mxu0 0.0
        %1602 = vmatprep.subr.mxu0 0.0
        %1603 = vmatpush1.xpose.msra.mxu0 0.0
        %1604 = vmatprep.subr.mxu0 0.0
        %1605 = vmatpush1.xpose.msra.mxu0 0.0
        %1606 = vmatprep.subr.mxu0 0.0
        %1607 = vmatpush1.xpose.msra.mxu0 0.0
        %1608 = vmatprep.subr.mxu0 0.0
        %1609 = vmatpush1.xpose.msra.mxu0 0.0
        %1610 = vmatprep.subr.mxu0 0.0
        %1611 = vmatpush1.xpose.msra.mxu0 0.0
        %1612 = vmatprep.subr.mxu0 0.0
        %1613 = vmatpush1.xpose.msra.mxu0 0.0
        %1614 = vmatprep.subr.mxu0 0.0
        %1615 = vmatpush1.xpose.msra.mxu0 %v1588
        %1616 = vmatprep.subr.mxu0 0.0
        %1617 = vmatpush1.xpose.msra.mxu0 %v1586
        %1618 = vmatprep.subr.mxu0 0.0
        %1619 = vmatpush1.xpose.msra.mxu0 %v1584
        %1620 = vmatprep.subr.mxu0 0.0
        %1621 = vmatpush1.xpose.msra.mxu0 %v1582
        %1622 = vmatprep.subr.mxu0 0.0
        %1623 = vmatpush2.xpose.msra.mxu0 0.0
        %1624 = vmatprep.subr.mxu0 0.0
        %1625 = vmatpush2.xpose.msra.mxu0 0.0
        %1626 = vmatprep.subr.mxu0 0.0
        %1627 = vmatpush2.xpose.msra.mxu0 0.0
        %1628 = vmatprep.subr.mxu0 0.0
        %1629 = vmatpush2.xpose.msra.mxu0 0.0
        %1630 = vmatprep.subr.mxu0 0.0
        %1631 = vmatpush2.xpose.msra.mxu0 0.0
        %1632 = vmatprep.subr.mxu0 0.0
        %1633 = vmatpush2.xpose.msra.mxu0 0.0
        %1634 = vmatprep.subr.mxu0 0.0
        %1635 = vmatpush2.xpose.msra.mxu0 0.0
        %1636 = vmatprep.subr.mxu0 0.0
        %1637 = vmatpush2.xpose.msra.mxu0 0.0
        %1638 = vmatprep.subr.mxu0 0.0
        %1639 = vmatpush2.xpose.msra.mxu0 0.0
        %1640 = vmatprep.subr.mxu0 0.0
        %1641 = vmatpush2.xpose.msra.mxu0 0.0
        %1642 = vmatprep.subr.mxu0 0.0
        %1643 = vmatpush2.xpose.msra.mxu0 0.0
        %1644 = vmatprep.subr.mxu0 0.0
        %1645 = vmatpush2.xpose.msra.mxu0 0.0
        %1646 = vmatprep.subr.mxu0 0.0
        %1647 = vmatpush2.xpose.msra.mxu0 0.0
        %1648 = vmatprep.subr.mxu0 0.0
        %1649 = vmatpush2.xpose.msra.mxu0 0.0
        %1650 = vmatprep.subr.mxu0 0.0
        %1651 = vmatpush2.xpose.msra.mxu0 0.0
        %1652 = vmatprep.subr.mxu0 0.0
        %1653 = vmatpush2.xpose.msra.mxu0 0.0
        %1654 = vmatprep.mubr.f32.mxu0 0.0
        %1655 = vmatmul.mubr.f32.gmra.mxu0 %v1580
        %v1656 = vpop.f32.mrf.mxu0
        %v1657 = vadd.f32 0.0, %v1656
        %v1658 = vpop.f32.mrf.mxu0
        %1659 = vdwg.mxu0
        %v1660 = vadd.f32 %v1401, %v1657
        %1661 = vrot.lane.b32.xlu0 %v719, 104
        %v1662 = vpop.permute.xlu0 %1661
        %1663 = vrot.lane.b32.xlu0 %v805, 104
        %v1664 = vpop.permute.xlu0 %1663
        %v1665 = vsel %vm894, %v1662, 0
        %v1667 = vsel %vm894, %v1664, 0
        %1669 = vmatprep.subr.mxu0 0.0
        %1670 = vmatpush1.xpose.msra.mxu0 0.0
        %1671 = vmatprep.subr.mxu0 0.0
        %1672 = vmatpush1.xpose.msra.mxu0 0.0
        %1673 = vmatprep.subr.mxu0 0.0
        %1674 = vmatpush1.xpose.msra.mxu0 0.0
        %1675 = vmatprep.subr.mxu0 0.0
        %1676 = vmatpush1.xpose.msra.mxu0 0.0
        %1677 = vmatprep.subr.mxu0 0.0
        %1678 = vmatpush1.xpose.msra.mxu0 0.0
        %1679 = vmatprep.subr.mxu0 0.0
        %1680 = vmatpush1.xpose.msra.mxu0 0.0
        %1681 = vmatprep.subr.mxu0 0.0
        %1682 = vmatpush1.xpose.msra.mxu0 0.0
        %1683 = vmatprep.subr.mxu0 0.0
        %1684 = vmatpush1.xpose.msra.mxu0 0.0
        %1685 = vmatprep.subr.mxu0 0.0
        %1686 = vmatpush1.xpose.msra.mxu0 0.0
        %1687 = vmatprep.subr.mxu0 0.0
        %1688 = vmatpush1.xpose.msra.mxu0 0.0
        %1689 = vmatprep.subr.mxu0 0.0
        %1690 = vmatpush1.xpose.msra.mxu0 0.0
        %1691 = vmatprep.subr.mxu0 0.0
        %1692 = vmatpush1.xpose.msra.mxu0 0.0
        %1693 = vmatprep.subr.mxu0 0.0
        %1694 = vmatpush1.xpose.msra.mxu0 0.0
        %1695 = vmatprep.subr.mxu0 0.0
        %1696 = vmatpush1.xpose.msra.mxu0 0.0
        %1697 = vmatprep.subr.mxu0 0.0
        %1698 = vmatpush1.xpose.msra.mxu0 0.0
        %1699 = vmatprep.subr.mxu0 0.0
        %1700 = vmatpush1.xpose.msra.mxu0 %v1667
        %1701 = vmatprep.subr.mxu0 0.0
        %1702 = vmatpush2.xpose.msra.mxu0 0.0
        %1703 = vmatprep.subr.mxu0 0.0
        %1704 = vmatpush2.xpose.msra.mxu0 0.0
        %1705 = vmatprep.subr.mxu0 0.0
        %1706 = vmatpush2.xpose.msra.mxu0 0.0
        %1707 = vmatprep.subr.mxu0 0.0
        %1708 = vmatpush2.xpose.msra.mxu0 0.0
        %1709 = vmatprep.subr.mxu0 0.0
        %1710 = vmatpush2.xpose.msra.mxu0 0.0
        %1711 = vmatprep.subr.mxu0 0.0
        %1712 = vmatpush2.xpose.msra.mxu0 0.0
        %1713 = vmatprep.subr.mxu0 0.0
        %1714 = vmatpush2.xpose.msra.mxu0 0.0
        %1715 = vmatprep.subr.mxu0 0.0
        %1716 = vmatpush2.xpose.msra.mxu0 0.0
        %1717 = vmatprep.subr.mxu0 0.0
        %1718 = vmatpush2.xpose.msra.mxu0 0.0
        %1719 = vmatprep.subr.mxu0 0.0
        %1720 = vmatpush2.xpose.msra.mxu0 0.0
        %1721 = vmatprep.subr.mxu0 0.0
        %1722 = vmatpush2.xpose.msra.mxu0 0.0
        %1723 = vmatprep.subr.mxu0 0.0
        %1724 = vmatpush2.xpose.msra.mxu0 0.0
        %1725 = vmatprep.subr.mxu0 0.0
        %1726 = vmatpush2.xpose.msra.mxu0 0.0
        %1727 = vmatprep.subr.mxu0 0.0
        %1728 = vmatpush2.xpose.msra.mxu0 0.0
        %1729 = vmatprep.subr.mxu0 0.0
        %1730 = vmatpush2.xpose.msra.mxu0 0.0
        %1731 = vmatprep.subr.mxu0 0.0
        %1732 = vmatpush2.xpose.msra.mxu0 0.0
        %1733 = vmatprep.mubr.f32.mxu0 0.0
        %1734 = vmatmul.mubr.f32.gmra.mxu0 %v1665
        %v1735 = vpop.f32.mrf.mxu0
        %v1736 = vadd.f32 0.0, %v1735
        %v1737 = vpop.f32.mrf.mxu0
        %1738 = vdwg.mxu0
        %v1739 = vmul.f32 %v1736, 0.35355338
        %v1740 = vsel %vm972, -1e+09, %v1739
        %v1741 = vsel %vm894, %v1740, -inf
        %1742 = vmax.xlane.f32.xlu0 %v1741
        %v1743 = vpop.xlane.xlu0 %1742
        %v1744 = vsub.f32 %v1740, %v1743
        %v1745 = vmul.f32 %v1744, 1.442695
        %v1746 = vpow.pop %v1745
        %v1747 = vsel %vm894, %v1746, 0.0
        %1748 = vadd.xlane.f32.xlu0 %v1747
        %v1749 = vpop.xlane.xlu0 %1748
        %v1750 = vrcp.pop %v1749
        %v1751 = vmul.f32 %v1746, %v1750
        %1752 = vrot.lane.b32.xlu0 %v891, 104
        %v1753 = vpop.permute.xlu0 %1752
        %v1756 = vsel %vm894, %v1751, 0
        %1758 = vmatprep.subr.mxu0 0.0
        %1759 = vmatpush1.msra.mxu0 0.0
        %1760 = vmatprep.subr.mxu0 0.0
        %1761 = vmatpush1.msra.mxu0 0.0
        %1762 = vmatprep.subr.mxu0 0.0
        %1763 = vmatpush1.msra.mxu0 0.0
        %1764 = vmatprep.subr.mxu0 0.0
        %1765 = vmatpush1.msra.mxu0 0.0
        %1766 = vmatprep.subr.mxu0 0.0
        %1767 = vmatpush1.msra.mxu0 0.0
        %1768 = vmatprep.subr.mxu0 0.0
        %1769 = vmatpush1.msra.mxu0 0.0
        %1770 = vmatprep.subr.mxu0 0.0
        %1771 = vmatpush1.msra.mxu0 0.0
        %1772 = vmatprep.subr.mxu0 0.0
        %1773 = vmatpush1.msra.mxu0 0.0
        %1774 = vmatprep.subr.mxu0 0.0
        %1775 = vmatpush1.msra.mxu0 0.0
        %1776 = vmatprep.subr.mxu0 0.0
        %1777 = vmatpush1.msra.mxu0 0.0
        %1778 = vmatprep.subr.mxu0 0.0
        %1779 = vmatpush1.msra.mxu0 0.0
        %1780 = vmatprep.subr.mxu0 0.0
        %1781 = vmatpush1.msra.mxu0 0.0
        %1782 = vmatprep.subr.mxu0 0.0
        %1783 = vmatpush1.msra.mxu0 0.0
        %1784 = vmatprep.subr.mxu0 0.0
        %1785 = vmatpush1.msra.mxu0 0.0
        %1786 = vmatprep.subr.mxu0 0.0
        %1787 = vmatpush1.msra.mxu0 0.0
        %1788 = vmatprep.subr.mxu0 0.0
        %1789 = vmatpush1.msra.mxu0 %v1753
        %1790 = vmatprep.subr.mxu0 0.0
        %1791 = vmatpush2.msra.mxu0 0.0
        %1792 = vmatprep.subr.mxu0 0.0
        %1793 = vmatpush2.msra.mxu0 0.0
        %1794 = vmatprep.subr.mxu0 0.0
        %1795 = vmatpush2.msra.mxu0 0.0
        %1796 = vmatprep.subr.mxu0 0.0
        %1797 = vmatpush2.msra.mxu0 0.0
        %1798 = vmatprep.subr.mxu0 0.0
        %1799 = vmatpush2.msra.mxu0 0.0
        %1800 = vmatprep.subr.mxu0 0.0
        %1801 = vmatpush2.msra.mxu0 0.0
        %1802 = vmatprep.subr.mxu0 0.0
        %1803 = vmatpush2.msra.mxu0 0.0
        %1804 = vmatprep.subr.mxu0 0.0
        %1805 = vmatpush2.msra.mxu0 0.0
        %1806 = vmatprep.subr.mxu0 0.0
        %1807 = vmatpush2.msra.mxu0 0.0
        %1808 = vmatprep.subr.mxu0 0.0
        %1809 = vmatpush2.msra.mxu0 0.0
        %1810 = vmatprep.subr.mxu0 0.0
        %1811 = vmatpush2.msra.mxu0 0.0
        %1812 = vmatprep.subr.mxu0 0.0
        %1813 = vmatpush2.msra.mxu0 0.0
        %1814 = vmatprep.subr.mxu0 0.0
        %1815 = vmatpush2.msra.mxu0 0.0
        %1816 = vmatprep.subr.mxu0 0.0
        %1817 = vmatpush2.msra.mxu0 0.0
        %1818 = vmatprep.subr.mxu0 0.0
        %1819 = vmatpush2.msra.mxu0 0.0
        %1820 = vmatprep.subr.mxu0 0.0
        %1821 = vmatpush2.msra.mxu0 0.0
        %1822 = vmatprep.mubr.f32.mxu0 0.0
        %1823 = vmatmul.mubr.f32.gmra.mxu0 %v1756
        %v1824 = vpop.f32.mrf.mxu0
        %v1825 = vadd.f32 0.0, %v1824
        %v1826 = vpop.f32.mrf.mxu0
        %1827 = vdwg.mxu0
        %1828 = vrot.lane.b32.xlu0 %v1058, 104
        %v1829 = vpop.permute.xlu0 %1828
        %1830 = vrot.lane.b32.xlu0 %v1059, 104
        %v1831 = vpop.permute.xlu0 %1830
        %1832 = vrot.lane.b32.xlu0 %v1060, 104
        %v1833 = vpop.permute.xlu0 %1832
        %1834 = vrot.lane.b32.xlu0 %v1061, 104
        %v1835 = vpop.permute.xlu0 %1834
        %v1837 = vsel %vm894, %v1825, 0
        %v1839 = vsel %vm894, %v1829, 0
        %v1841 = vsel %vm894, %v1831, 0
        %v1843 = vsel %vm894, %v1833, 0
        %v1845 = vsel %vm894, %v1835, 0
        %1847 = vmatprep.subr.mxu0 0.0
        %1848 = vmatpush1.xpose.msra.mxu0 0.0
        %1849 = vmatprep.subr.mxu0 0.0
        %1850 = vmatpush1.xpose.msra.mxu0 0.0
        %1851 = vmatprep.subr.mxu0 0.0
        %1852 = vmatpush1.xpose.msra.mxu0 0.0
        %1853 = vmatprep.subr.mxu0 0.0
        %1854 = vmatpush1.xpose.msra.mxu0 0.0
        %1855 = vmatprep.subr.mxu0 0.0
        %1856 = vmatpush1.xpose.msra.mxu0 0.0
        %1857 = vmatprep.subr.mxu0 0.0
        %1858 = vmatpush1.xpose.msra.mxu0 0.0
        %1859 = vmatprep.subr.mxu0 0.0
        %1860 = vmatpush1.xpose.msra.mxu0 0.0
        %1861 = vmatprep.subr.mxu0 0.0
        %1862 = vmatpush1.xpose.msra.mxu0 0.0
        %1863 = vmatprep.subr.mxu0 0.0
        %1864 = vmatpush1.xpose.msra.mxu0 0.0
        %1865 = vmatprep.subr.mxu0 0.0
        %1866 = vmatpush1.xpose.msra.mxu0 0.0
        %1867 = vmatprep.subr.mxu0 0.0
        %1868 = vmatpush1.xpose.msra.mxu0 0.0
        %1869 = vmatprep.subr.mxu0 0.0
        %1870 = vmatpush1.xpose.msra.mxu0 0.0
        %1871 = vmatprep.subr.mxu0 0.0
        %1872 = vmatpush1.xpose.msra.mxu0 %v1845
        %1873 = vmatprep.subr.mxu0 0.0
        %1874 = vmatpush1.xpose.msra.mxu0 %v1843
        %1875 = vmatprep.subr.mxu0 0.0
        %1876 = vmatpush1.xpose.msra.mxu0 %v1841
        %1877 = vmatprep.subr.mxu0 0.0
        %1878 = vmatpush1.xpose.msra.mxu0 %v1839
        %1879 = vmatprep.subr.mxu0 0.0
        %1880 = vmatpush2.xpose.msra.mxu0 0.0
        %1881 = vmatprep.subr.mxu0 0.0
        %1882 = vmatpush2.xpose.msra.mxu0 0.0
        %1883 = vmatprep.subr.mxu0 0.0
        %1884 = vmatpush2.xpose.msra.mxu0 0.0
        %1885 = vmatprep.subr.mxu0 0.0
        %1886 = vmatpush2.xpose.msra.mxu0 0.0
        %1887 = vmatprep.subr.mxu0 0.0
        %1888 = vmatpush2.xpose.msra.mxu0 0.0
        %1889 = vmatprep.subr.mxu0 0.0
        %1890 = vmatpush2.xpose.msra.mxu0 0.0
        %1891 = vmatprep.subr.mxu0 0.0
        %1892 = vmatpush2.xpose.msra.mxu0 0.0
        %1893 = vmatprep.subr.mxu0 0.0
        %1894 = vmatpush2.xpose.msra.mxu0 0.0
        %1895 = vmatprep.subr.mxu0 0.0
        %1896 = vmatpush2.xpose.msra.mxu0 0.0
        %1897 = vmatprep.subr.mxu0 0.0
        %1898 = vmatpush2.xpose.msra.mxu0 0.0
        %1899 = vmatprep.subr.mxu0 0.0
        %1900 = vmatpush2.xpose.msra.mxu0 0.0
        %1901 = vmatprep.subr.mxu0 0.0
        %1902 = vmatpush2.xpose.msra.mxu0 0.0
        %1903 = vmatprep.subr.mxu0 0.0
        %1904 = vmatpush2.xpose.msra.mxu0 0.0
        %1905 = vmatprep.subr.mxu0 0.0
        %1906 = vmatpush2.xpose.msra.mxu0 0.0
        %1907 = vmatprep.subr.mxu0 0.0
        %1908 = vmatpush2.xpose.msra.mxu0 0.0
        %1909 = vmatprep.subr.mxu0 0.0
        %1910 = vmatpush2.xpose.msra.mxu0 0.0
        %1911 = vmatprep.mubr.f32.mxu0 0.0
        %1912 = vmatmul.mubr.f32.gmra.mxu0 %v1837
        %v1913 = vpop.f32.mrf.mxu0
        %v1914 = vadd.f32 0.0, %v1913
        %v1915 = vpop.f32.mrf.mxu0
        %1916 = vdwg.mxu0
        %v1917 = vadd.f32 %v1660, %v1914
        %v1918 = vld [vmem:[%s6] sm:$0x1]
        %v1920 = vlaneseq
        %v1921 = vshrl.u32 %v1920, 7
        %v1922 = vsub.s32 0, %v1921
        %v1923 = vrot.slane %v1918, %v1922
        %v1925 = vadd.f32 %v1917, %v1923
        %v1926 = vadd.f32 %v1925, %v630
        %v1927 = vld [vmem:[%s7] sm:$0x1]
        %v1928 = vld [vmem:[%s8] sm:$0x1]
        %v1929 = vsel %vm636, %v1926, 0.0
        %1930 = vadd.xlane.f32.xlu0 %v1929
        %v1931 = vpop.xlane.xlu0 %1930
        %v1932 = vrcp.pop 32.0
        %v1933 = vmul.f32 %v1931, %v1932
        %v1934 = vsub.f32 %v1926, %v1933
        %v1935 = vmul.f32 %v1934, %v1934
        %v1936 = vsel %vm636, %v1935, 0.0
        %1937 = vadd.xlane.f32.xlu0 %v1936
        %v1938 = vpop.xlane.xlu0 %1937
        %v1939 = vmul.f32 %v1938, %v1932
        %v1940 = vadd.f32 %v1939, 1e-05
        %v1941 = vrsqrt.pop %v1940
        %v1942 = vmul.f32 %v1934, %v1941
        %v1944 = vlaneseq
        %v1945 = vshrl.u32 %v1944, 7
        %v1946 = vsub.s32 0, %v1945
        %v1947 = vrot.slane %v1927, %v1946
        %v1949 = vmul.f32 %v1942, %v1947
        %v1951 = vlaneseq
        %v1952 = vshrl.u32 %v1951, 7
        %v1953 = vsub.s32 0, %v1952
        %v1954 = vrot.slane %v1928, %v1953
        %v1956 = vadd.f32 %v1949, %v1954
        %v1957 = vld [vmem:[%s9] sm:$0x1]
        %v1958 = vld [vmem:[%s10] sm:$0x1]
        %v1959 = vsel %vm636, %v1956, 0.0
        %1960 = vadd.xlane.f32.xlu0 %v1959
        %v1961 = vpop.xlane.xlu0 %1960
        %v1962 = vmul.f32 %v1961, %v1932
        %v1963 = vsub.f32 %v1956, %v1962
        %v1964 = vmul.f32 %v1963, %v1963
        %v1965 = vsel %vm636, %v1964, 0.0
        %1966 = vadd.xlane.f32.xlu0 %v1965
        %v1967 = vpop.xlane.xlu0 %1966
        %v1968 = vmul.f32 %v1967, %v1932
        %v1969 = vadd.f32 %v1968, 1e-05
        %v1970 = vrsqrt.pop %v1969
        %v1971 = vmul.f32 %v1963, %v1970
        %v1973 = vlaneseq
        %v1974 = vshrl.u32 %v1973, 7
        %v1975 = vsub.s32 0, %v1974
        %v1976 = vrot.slane %v1957, %v1975
        %v1978 = vmul.f32 %v1971, %v1976
        %v1980 = vlaneseq
        %v1981 = vshrl.u32 %v1980, 7
        %v1982 = vsub.s32 0, %v1981
        %v1983 = vrot.slane %v1958, %v1982
        %v1985 = vadd.f32 %v1978, %v1983
        %v1986 = vld [vmem:[%s11] sm:$0xff]
        %v1987 = vld [vmem:[%s11 + $0x8] sm:$0xff]
        %v1988 = vld [vmem:[%s11 + $0x10] sm:$0xff]
        %v1989 = vld [vmem:[%s11 + $0x18] sm:$0xff]
        %v1990 = vld [vmem:[%s11 + $0x20] sm:$0xff]
        %v1991 = vld [vmem:[%s11 + $0x28] sm:$0xff]
        %v1992 = vld [vmem:[%s11 + $0x30] sm:$0xff]
        %v1993 = vld [vmem:[%s11 + $0x38] sm:$0xff]
        %v1994 = vld [vmem:[%s12] sm:$0x1]
        %v1996 = vlaneseq
        %v1997 = vshrl.u32 %v1996, 7
        %v1998 = vsub.s32 0, %v1997
        %v1999 = vrot.slane %v1994, %v1998
        %v2002 = vsel %vm636, %v1985, 0
        %v2005 = vsel %vm636, %v1986, 0
        %v2008 = vsel %vm636, %v1987, 0
        %v2011 = vsel %vm636, %v1988, 0
        %v2014 = vsel %vm636, %v1989, 0
        %v2017 = vsel %vm636, %v1990, 0
        %v2020 = vsel %vm636, %v1991, 0
        %v2023 = vsel %vm636, %v1992, 0
        %v2026 = vsel %vm636, %v1993, 0
        %2028 = vmatprep.subr.mxu0 0.0
        %2029 = vmatpush1.xpose.msra.mxu0 0.0
        %2030 = vmatprep.subr.mxu0 0.0
        %2031 = vmatpush1.xpose.msra.mxu0 0.0
        %2032 = vmatprep.subr.mxu0 0.0
        %2033 = vmatpush1.xpose.msra.mxu0 0.0
        %2034 = vmatprep.subr.mxu0 0.0
        %2035 = vmatpush1.xpose.msra.mxu0 0.0
        %2036 = vmatprep.subr.mxu0 0.0
        %2037 = vmatpush1.xpose.msra.mxu0 0.0
        %2038 = vmatprep.subr.mxu0 0.0
        %2039 = vmatpush1.xpose.msra.mxu0 0.0
        %2040 = vmatprep.subr.mxu0 0.0
        %2041 = vmatpush1.xpose.msra.mxu0 0.0
        %2042 = vmatprep.subr.mxu0 0.0
        %2043 = vmatpush1.xpose.msra.mxu0 0.0
        %2044 = vmatprep.subr.mxu0 0.0
        %2045 = vmatpush1.xpose.msra.mxu0 %v2026
        %2046 = vmatprep.subr.mxu0 0.0
        %2047 = vmatpush1.xpose.msra.mxu0 %v2023
        %2048 = vmatprep.subr.mxu0 0.0
        %2049 = vmatpush1.xpose.msra.mxu0 %v2020
        %2050 = vmatprep.subr.mxu0 0.0
        %2051 = vmatpush1.xpose.msra.mxu0 %v2017
        %2052 = vmatprep.subr.mxu0 0.0
        %2053 = vmatpush1.xpose.msra.mxu0 %v2014
        %2054 = vmatprep.subr.mxu0 0.0
        %2055 = vmatpush1.xpose.msra.mxu0 %v2011
        %2056 = vmatprep.subr.mxu0 0.0
        %2057 = vmatpush1.xpose.msra.mxu0 %v2008
        %2058 = vmatprep.subr.mxu0 0.0
        %2059 = vmatpush1.xpose.msra.mxu0 %v2005
        %2060 = vmatprep.subr.mxu0 0.0
        %2061 = vmatpush2.xpose.msra.mxu0 0.0
        %2062 = vmatprep.subr.mxu0 0.0
        %2063 = vmatpush2.xpose.msra.mxu0 0.0
        %2064 = vmatprep.subr.mxu0 0.0
        %2065 = vmatpush2.xpose.msra.mxu0 0.0
        %2066 = vmatprep.subr.mxu0 0.0
        %2067 = vmatpush2.xpose.msra.mxu0 0.0
        %2068 = vmatprep.subr.mxu0 0.0
        %2069 = vmatpush2.xpose.msra.mxu0 0.0
        %2070 = vmatprep.subr.mxu0 0.0
        %2071 = vmatpush2.xpose.msra.mxu0 0.0
        %2072 = vmatprep.subr.mxu0 0.0
        %2073 = vmatpush2.xpose.msra.mxu0 0.0
        %2074 = vmatprep.subr.mxu0 0.0
        %2075 = vmatpush2.xpose.msra.mxu0 0.0
        %2076 = vmatprep.subr.mxu0 0.0
        %2077 = vmatpush2.xpose.msra.mxu0 0.0
        %2078 = vmatprep.subr.mxu0 0.0
        %2079 = vmatpush2.xpose.msra.mxu0 0.0
        %2080 = vmatprep.subr.mxu0 0.0
        %2081 = vmatpush2.xpose.msra.mxu0 0.0
        %2082 = vmatprep.subr.mxu0 0.0
        %2083 = vmatpush2.xpose.msra.mxu0 0.0
        %2084 = vmatprep.subr.mxu0 0.0
        %2085 = vmatpush2.xpose.msra.mxu0 0.0
        %2086 = vmatprep.subr.mxu0 0.0
        %2087 = vmatpush2.xpose.msra.mxu0 0.0
        %2088 = vmatprep.subr.mxu0 0.0
        %2089 = vmatpush2.xpose.msra.mxu0 0.0
        %2090 = vmatprep.subr.mxu0 0.0
        %2091 = vmatpush2.xpose.msra.mxu0 0.0
        %2092 = vmatprep.mubr.f32.mxu0 0.0
        %2093 = vmatmul.mubr.f32.gmra.mxu0 %v2002
        %v2094 = vpop.f32.mrf.mxu0
        %v2095 = vadd.f32 %v1999, %v2094
        %v2096 = vpop.f32.mrf.mxu0
        %2097 = vdwg.mxu0
        %v2098 = vmax.f32 %v2095, 0.0
        %v2099 = vld [vmem:[#allocation8] sm:$0xff]
        %v2100 = vld [vmem:[#allocation8 + $0x8] sm:$0xff]
        %v2101 = vld [vmem:[#allocation8 + $0x10] sm:$0xff]
        %v2102 = vld [vmem:[#allocation8 + $0x18] sm:$0xff]
        %v2103 = vld [vmem:[%s14] sm:$0x1]
        %v2105 = vlaneseq
        %v2106 = vshrl.u32 %v2105, 7
        %v2107 = vsub.s32 0, %v2106
        %v2108 = vrot.slane %v2103, %v2107
        %vm2110 = vcmask 523264
        %v2112 = vsel %vm2110, %v2098, 0
        %v2115 = vsel %vm2110, %v2099, 0
        %v2118 = vsel %vm2110, %v2100, 0
        %v2121 = vsel %vm2110, %v2101, 0
        %v2124 = vsel %vm2110, %v2102, 0
        %2126 = vmatprep.subr.mxu0 0.0
        %2127 = vmatpush1.xpose.msra.mxu0 0.0
        %2128 = vmatprep.subr.mxu0 0.0
        %2129 = vmatpush1.xpose.msra.mxu0 0.0
        %2130 = vmatprep.subr.mxu0 0.0
        %2131 = vmatpush1.xpose.msra.mxu0 0.0
        %2132 = vmatprep.subr.mxu0 0.0
        %2133 = vmatpush1.xpose.msra.mxu0 0.0
        %2134 = vmatprep.subr.mxu0 0.0
        %2135 = vmatpush1.xpose.msra.mxu0 0.0
        %2136 = vmatprep.subr.mxu0 0.0
        %2137 = vmatpush1.xpose.msra.mxu0 0.0
        %2138 = vmatprep.subr.mxu0 0.0
        %2139 = vmatpush1.xpose.msra.mxu0 0.0
        %2140 = vmatprep.subr.mxu0 0.0
        %2141 = vmatpush1.xpose.msra.mxu0 0.0
        %2142 = vmatprep.subr.mxu0 0.0
        %2143 = vmatpush1.xpose.msra.mxu0 0.0
        %2144 = vmatprep.subr.mxu0 0.0
        %2145 = vmatpush1.xpose.msra.mxu0 0.0
        %2146 = vmatprep.subr.mxu0 0.0
        %2147 = vmatpush1.xpose.msra.mxu0 0.0
        %2148 = vmatprep.subr.mxu0 0.0
        %2149 = vmatpush1.xpose.msra.mxu0 0.0
        %2150 = vmatprep.subr.mxu0 0.0
        %2151 = vmatpush1.xpose.msra.mxu0 %v2124
        %2152 = vmatprep.subr.mxu0 0.0
        %2153 = vmatpush1.xpose.msra.mxu0 %v2121
        %2154 = vmatprep.subr.mxu0 0.0
        %2155 = vmatpush1.xpose.msra.mxu0 %v2118
        %2156 = vmatprep.subr.mxu0 0.0
        %2157 = vmatpush1.xpose.msra.mxu0 %v2115
        %2158 = vmatprep.subr.mxu0 0.0
        %2159 = vmatpush2.xpose.msra.mxu0 0.0
        %2160 = vmatprep.subr.mxu0 0.0
        %2161 = vmatpush2.xpose.msra.mxu0 0.0
        %2162 = vmatprep.subr.mxu0 0.0
        %2163 = vmatpush2.xpose.msra.mxu0 0.0
        %2164 = vmatprep.subr.mxu0 0.0
        %2165 = vmatpush2.xpose.msra.mxu0 0.0
        %2166 = vmatprep.subr.mxu0 0.0
        %2167 = vmatpush2.xpose.msra.mxu0 0.0
        %2168 = vmatprep.subr.mxu0 0.0
        %2169 = vmatpush2.xpose.msra.mxu0 0.0
        %2170 = vmatprep.subr.mxu0 0.0
        %2171 = vmatpush2.xpose.msra.mxu0 0.0
        %2172 = vmatprep.subr.mxu0 0.0
        %2173 = vmatpush2.xpose.msra.mxu0 0.0
        %2174 = vmatprep.subr.mxu0 0.0
        %2175 = vmatpush2.xpose.msra.mxu0 0.0
        %2176 = vmatprep.subr.mxu0 0.0
        %2177 = vmatpush2.xpose.msra.mxu0 0.0
        %2178 = vmatprep.subr.mxu0 0.0
        %2179 = vmatpush2.xpose.msra.mxu0 0.0
        %2180 = vmatprep.subr.mxu0 0.0
        %2181 = vmatpush2.xpose.msra.mxu0 0.0
        %2182 = vmatprep.subr.mxu0 0.0
        %2183 = vmatpush2.xpose.msra.mxu0 0.0
        %2184 = vmatprep.subr.mxu0 0.0
        %2185 = vmatpush2.xpose.msra.mxu0 0.0
        %2186 = vmatprep.subr.mxu0 0.0
        %2187 = vmatpush2.xpose.msra.mxu0 0.0
        %2188 = vmatprep.subr.mxu0 0.0
        %2189 = vmatpush2.xpose.msra.mxu0 0.0
        %2190 = vmatprep.mubr.f32.mxu0 0.0
        %2191 = vmatmul.mubr.f32.gmra.mxu0 %v2112
        %v2192 = vpop.f32.mrf.mxu0
        %v2193 = vadd.f32 %v2108, %v2192
        %v2194 = vpop.f32.mrf.mxu0
        %2195 = vdwg.mxu0
        %v2196 = vadd.f32 %v2193, %v1956
        %v2197 = vld [vmem:[%s15] sm:$0x1]
        %v2198 = vld [vmem:[%s16] sm:$0x1]
        %v2199 = vsel %vm636, %v2196, 0.0
        %2200 = vadd.xlane.f32.xlu0 %v2199
        %v2201 = vpop.xlane.xlu0 %2200
        %v2202 = vmul.f32 %v2201, %v1932
        %v2203 = vsub.f32 %v2196, %v2202
        %v2204 = vmul.f32 %v2203, %v2203
        %v2205 = vsel %vm636, %v2204, 0.0
        %2206 = vadd.xlane.f32.xlu0 %v2205
        %v2207 = vpop.xlane.xlu0 %2206
        %v2208 = vmul.f32 %v2207, %v1932
        %v2209 = vadd.f32 %v2208, 1e-05
        %v2210 = vrsqrt.pop %v2209
        %v2211 = vmul.f32 %v2203, %v2210
        %v2213 = vlaneseq
        %v2214 = vshrl.u32 %v2213, 7
        %v2215 = vsub.s32 0, %v2214
        %v2216 = vrot.slane %v2197, %v2215
        %v2218 = vmul.f32 %v2211, %v2216
        %v2220 = vlaneseq
        %v2221 = vshrl.u32 %v2220, 7
        %v2222 = vsub.s32 0, %v2221
        %v2223 = vrot.slane %v2198, %v2222
        %v2225 = vadd.f32 %v2218, %v2223
        %2226 = vst.msk [vmem:[%s629] sm:$0xff] %vm636, %v2225
        %s2227 = sand.u32 %s413, 1
        %s2228 = scalar_lea.sflag [#allocation4], %s2227
        %s2229 = sand.u32 %s413, 1
        %s2230 = smul.addr %s2229, 8
        %s2231 = scalar_lea.vmem [#allocation10], %s2230
        // Predicated region
        $region105: #{tpu_custom_call.1} parent=87 // pred_check
          %p2232 = pneg %p423
        $region106: #{tpu_custom_call.1} parent=87 // pred_check_branch
          %2234 = sbr.rel (%p2232) target = $region108
        $region107: #{tpu_custom_call.1} parent=87 // pred_region
          %s2236 = ssub.s32 128, 128
          %2237 = vsyncadd %s2228, %s2236
          %s2238 = smul.addr %s38, 128
          %s2239 = scalar_lea.hbm %s17, %s2238
          %s2241 = sshll.u32 %s2231, 4
          %s2242 = int_to_ptr.vmem [resolvable:$true] %s2241
          %2244 = dma.vmem_to_hbm [thread:$0]  %s2242, 128, %s2239, %s2228
        $region108: #{tpu_custom_call.1} parent=87 // pred_fallthru
          _
      $region88: #{tpu_custom_call.1} parent=5 // pred_fallthru
        _
      %p2245 = scmp.le.s32.totalorder 2, %s33
      // Predicated region
      $region109: #{tpu_custom_call.1} parent=5 // pred_check
        %p2246 = pneg %p2245
      $region110: #{tpu_custom_call.1} parent=5 // pred_check_branch
        %2248 = sbr.rel (%p2246) target = $region112
      $region111: #{tpu_custom_call.1} parent=5 // pred_region
        %s2249 = ssub.s32 %s33, 2
        // Predicated region
        $region113: #{tpu_custom_call.1} parent=111 // pred_check
          %p2250 = pneg %p429
        $region114: #{tpu_custom_call.1} parent=111 // pred_check_branch
          %2252 = sbr.rel (%p2250) target = $region116
        $region115: #{tpu_custom_call.1} parent=111 // pred_region
          %s2253 = sand.u32 %s414, 1
          %s2254 = scalar_lea.sflag [#allocation4], %s2253
          %s2255 = sand.u32 %s414, 1
          %s2256 = smul.addr %s2255, 8
          %s2257 = scalar_lea.vmem [#allocation10], %s2256
          %2258 = dma.done %s2254, 128
        $region116: #{tpu_custom_call.1} parent=111 // pred_fallthru
          _
      $region112: #{tpu_custom_call.1} parent=5 // pred_fallthru
        _
    $region6: #{tpu_custom_call.1} parent=1 // loop_footer
      %s37 = sadd.s32 1, %s33
    $region7: #{tpu_custom_call.1} parent=1 // loop_footer_branch
      %32 = sbr.rel target = $region3
    $region8: #{tpu_custom_call.1} parent=1 // loop_exit
      _
    %2259 = vsyncpa [#allocation3], 1
    %s2260 = scalar_lea.sflag [#allocation3], 1
    %2261 = vsyncpa %s2260, 1
    %2262 = vsyncpa [#allocation6], 1
    %s2263 = scalar_lea.sflag [#allocation6], 1
    %2264 = vsyncpa %s2263, 1
    %2265 = vsyncpa [#allocation9], 1
    %2266 = vsyncpa [#allocation4], 1
    %s2267 = scalar_lea.sflag [#allocation4], 1
    %2268 = vsyncpa %s2267, 1

</llo_original>
